<compile_context>
chip_gen: v7x
topology: tpu7x:2x2x1
jax: 0.10.0
libtpu: 0.0.40
codegen_flags: <defaults>
</compile_context>

<pallas_src>
import functools

import jax
import jax.numpy as jnp
from jax.experimental import pallas as pl
from jax.experimental.pallas import tpu as pltpu

EPS = 1e-5  # nn.InstanceNorm2d default


def _resblock_kernel(x_ref, m_ref, w1_ref, w2_ref, o_ref, *, W):
    """Per-sample ResBlock in channel-major layout.

    x_ref  : (1, C, H*W)  input sample, channel-major, lane-dense
    m_ref  : (8, 1, H*W)  boundary masks for the 8 non-center taps
    w1_ref : (9, C, C)    conv1 weights, tap-major, each (Cout, Cin)
    w2_ref : (9, C, C)    conv2 weights
    o_ref  : (1, C, H*W)  output sample
    """
    C = x_ref.shape[1]
    HW = x_ref.shape[2]

    xv = x_ref[0]  # (C, HW) f32, loaded once and reused for the residual

    def conv3x3(inp, w_ref):
        # out[co, p] = sum_{tap, ci} w[tap][co, ci] * inp[ci, p + shift(tap)]
        # with out-of-bounds source pixels zeroed (zero padding), realized by
        # XLU lane rotations + per-tap masks (no padded buffers).
        acc = jnp.zeros((C, HW), jnp.float32)
        k = 0  # weight/tap index (0..8)
        m = 0  # mask index (0..7, center tap skipped)
        for oy in (-1, 0, 1):
            for ox in (-1, 0, 1):
                s = oy * W + ox
                if s == 0:
                    tap = inp                      # center tap: mask is all-ones
                else:
                    # shifted[:, p] = inp[:, p + s]   (XLU lane rotation)
                    shifted = pltpu.roll(inp, (-s) % HW, axis=1)
                    tap = shifted * m_ref[m]       # zero the wrapped positions
                    m += 1
                acc = acc + jnp.dot(w_ref[k], tap.astype(w_ref.dtype),
                                    preferred_element_type=jnp.float32)
                k += 1
        return acc

    def inorm(a):
        # Single-pass per-channel statistics over H*W (biased variance),
        # exactly matching nn.InstanceNorm2d(affine=False).
        mean = jnp.mean(a, axis=1, keepdims=True)          # (C, 1)
        meansq = jnp.mean(a * a, axis=1, keepdims=True)    # (C, 1)
        var = meansq - mean * mean
        return (a - mean) * jax.lax.rsqrt(var + EPS)       # rsqrt -> EUP

    # conv1 -> IN -> ReLU   (conv bias cancelled exactly by the IN mean-sub)
    y = jnp.maximum(inorm(conv3x3(xv, w1_ref)), 0.0)
    # conv2 -> IN
    z = inorm(conv3x3(y, w2_ref))
    # residual add, lane-dense store
    o_ref[0] = (z + xv).astype(o_ref.dtype)


@jax.jit
def resblock_pallas(x_nchw, w1, b1, w2, b2):
    """x_nchw: (N, C, H, W) f32. Weights in PyTorch layout (O, I, kh, kw).

    b1/b2 are accepted for interface parity but never used: each conv is
    immediately followed by InstanceNorm, whose per-channel mean subtraction
    cancels the bias exactly.
    """
    del b1, b2
    N, C, H, W = x_nchw.shape
    HW = H * W

    # NCHW -> (N, C, H*W): pure metadata reshape, channel-major, lane-dense.
    x_flat = x_nchw.reshape(N, C, HW)

    # bf16 MXU operands (f32 accumulation) once C is MXU-relevant; exact f32
    # for the tiny-C regime so the forward pass stays faithful to the f32
    # PyTorch module.
    compute_dtype = jnp.bfloat16 if C >= 64 else jnp.float32

    # (O, I, kh, kw) -> (tap = kh*3 + kw, O, I): each tap is a (Cout, Cin) matmul.
    def repack(w):
        return jnp.transpose(w, (2, 3, 0, 1)).reshape(9, C, C).astype(compute_dtype)

    w1k, w2k = repack(w1), repack(w2)

    # Boundary masks implementing zero padding without padded buffers:
    # mask[tap, 0, p] = 1 iff the shifted source pixel lies inside the image.
    # The center tap is all-ones and is skipped (8 masks total).
    yy, xx = jnp.meshgrid(jnp.arange(H), jnp.arange(W), indexing="ij")
    mask_list = []
    for oy in (-1, 0, 1):
        for ox in (-1, 0, 1):
            if oy == 0 and ox == 0:
                continue
            valid = ((yy + oy >= 0) & (yy + oy < H) &
                     (xx + ox >= 0) & (xx + ox < W))
            mask_list.append(valid.reshape(1, HW))
    masks = jnp.stack(mask_list).astype(jnp.float32)  # (8, 1, HW)

    kernel = functools.partial(_resblock_kernel, W=W)

    out_flat = pl.pallas_call(
        kernel,
        out_shape=jax.ShapeDtypeStruct((N, C, HW), jnp.float32),
        grid_spec=pltpu.PrefetchScalarGridSpec(
            num_scalar_prefetch=0,
            grid=(N,),
            in_specs=[
                pl.BlockSpec((1, C, HW), lambda n: (n, 0, 0)),
                pl.BlockSpec((8, 1, HW), lambda n: (0, 0, 0)),
                pl.BlockSpec((9, C, C), lambda n: (0, 0, 0)),
                pl.BlockSpec((9, C, C), lambda n: (0, 0, 0)),
            ],
            out_specs=pl.BlockSpec((1, C, HW), lambda n: (n, 0, 0)),
        ),
        compiler_params=pltpu.CompilerParams(
            dimension_semantics=("parallel",)),
    )(x_flat, masks, w1k, w2k)

    # (N, C, H*W) -> (N, C, H, W): metadata reshape, already NCHW order.
    return out_flat.reshape(N, C, H, W)


def resblock_ref(x, w1, b1, w2, b2):
    """Pure-JAX reference matching the PyTorch ResBlock semantics (NCHW)."""
    def conv(inp, w, b):
        y = jax.lax.conv_general_dilated(
            inp, w, window_strides=(1, 1), padding=((1, 1), (1, 1)),
            dimension_numbers=("NCHW", "OIHW", "NCHW"))
        return y + b.reshape(1, -1, 1, 1)

    def inorm(y):
        m = jnp.mean(y, axis=(2, 3), keepdims=True)
        v = jnp.mean((y - m) ** 2, axis=(2, 3), keepdims=True)
        return (y - m) / jnp.sqrt(v + EPS)

    h = jnp.maximum(inorm(conv(x, w1, b1)), 0.0)
    z = inorm(conv(h, w2, b2))
    return z + x


if __name__ == "__main__":
    N, C, H, W = 2, 4, 16, 16

    key = jax.random.PRNGKey(0)
    kx, kw1, kb1, kw2, kb2 = jax.random.split(key, 5)

    x = jax.random.normal(kx, (N, C, H, W), jnp.float32)
    # Conv2d weights in PyTorch layout (out_ch, in_ch, kh, kw)
    w1 = jax.random.normal(kw1, (C, C, 3, 3), jnp.float32) * 0.2
    b1 = jax.random.normal(kb1, (C,), jnp.float32) * 0.1
    w2 = jax.random.normal(kw2, (C, C, 3, 3), jnp.float32) * 0.2
    b2 = jax.random.normal(kb2, (C,), jnp.float32) * 0.1

    out = jax.block_until_ready(resblock_pallas(x, w1, b1, w2, b2))
    ref = jax.block_until_ready(resblock_ref(x, w1, b1, w2, b2))

    assert out.shape == (N, C, H, W)
    max_err = float(jnp.max(jnp.abs(out - ref)))
    assert jnp.allclose(out, ref, rtol=2e-4, atol=2e-4), max_err

    print("KERNEL_OK")
</pallas_src>

<mosaic_0001>
module attributes {stable_mosaic.version = 11 : i64} {
  func.func @_resblock_kernel(%arg0: i32, %arg1: memref<1x4x256xf32, #tpu.memory_space<vmem>>, %arg2: memref<8x1x256xf32, #tpu.memory_space<vmem>>, %arg3: memref<9x4x4xf32, #tpu.memory_space<vmem>>, %arg4: memref<9x4x4xf32, #tpu.memory_space<vmem>>, %arg5: memref<1x4x256xf32, #tpu.memory_space<vmem>>) attributes {dimension_semantics = [#tpu.dimension_semantics<parallel>], iteration_bounds = array<i64: 2>, scalar_prefetch = 0 : i64, scratch_operands = 0 : i64, tpu.core_type = #tpu.core_type<tc>, window_params = [{transform_indices = @transform_0, window_bounds = array<i64: 1, 4, 256>}, {pipeline_mode = #tpu.pipeline_mode<synchronous>, transform_indices = @transform_1, window_bounds = array<i64: 8, 1, 256>}, {pipeline_mode = #tpu.pipeline_mode<synchronous>, transform_indices = @transform_2, window_bounds = array<i64: 9, 4, 4>}, {pipeline_mode = #tpu.pipeline_mode<synchronous>, transform_indices = @transform_3, window_bounds = array<i64: 9, 4, 4>}, {transform_indices = @transform_4, window_bounds = array<i64: 1, 4, 256>}]} {
    %c0 = arith.constant 0 : index
    %c0_0 = arith.constant 0 : index
    %c0_1 = arith.constant 0 : index
    %0 = vector.load %arg1[%c0, %c0_0, %c0_1] : memref<1x4x256xf32, #tpu.memory_space<vmem>>, vector<1x4x256xf32>
    %1 = vector.shape_cast %0 : vector<1x4x256xf32> to vector<4x256xf32>
    %cst = arith.constant 0.000000e+00 : f32
    %2 = vector.broadcast %cst : f32 to vector<4x256xf32>
    %c17_i32 = arith.constant 17 : i32
    %3 = tpu.dynamic_rotate %1 by %c17_i32 dim 1 : vector<4x256xf32>, i32 -> vector<4x256xf32>
    %c0_2 = arith.constant 0 : index
    %c0_3 = arith.constant 0 : index
    %c0_4 = arith.constant 0 : index
    %4 = vector.load %arg2[%c0_2, %c0_3, %c0_4] : memref<8x1x256xf32, #tpu.memory_space<vmem>>, vector<1x1x256xf32>
    %5 = vector.shape_cast %4 : vector<1x1x256xf32> to vector<1x256xf32>
    %6 = vector.broadcast %5 : vector<1x256xf32> to vector<4x256xf32>
    %7 = arith.mulf %3, %6 : vector<4x256xf32>
    %c0_5 = arith.constant 0 : index
    %c0_6 = arith.constant 0 : index
    %c0_7 = arith.constant 0 : index
    %8 = vector.load %arg3[%c0_5, %c0_6, %c0_7] : memref<9x4x4xf32, #tpu.memory_space<vmem>>, vector<1x4x4xf32>
    %9 = vector.shape_cast %8 : vector<1x4x4xf32> to vector<4x4xf32>
    %cst_8 = arith.constant dense<0.000000e+00> : vector<4x256xf32>
    %10 = tpu.matmul %9, %7, %cst_8 {dimension_numbers = #tpu.dot_dimension_numbers<[1], [0], [0], [1], [0, 0, 1, 1], [], []>} : vector<4x4xf32>, vector<4x256xf32>, vector<4x256xf32> -> vector<4x256xf32>
    %11 = arith.addf %2, %10 : vector<4x256xf32>
    %c16_i32 = arith.constant 16 : i32
    %12 = tpu.dynamic_rotate %1 by %c16_i32 dim 1 : vector<4x256xf32>, i32 -> vector<4x256xf32>
    %c1 = arith.constant 1 : index
    %c0_9 = arith.constant 0 : index
    %c0_10 = arith.constant 0 : index
    %13 = vector.load %arg2[%c1, %c0_9, %c0_10] : memref<8x1x256xf32, #tpu.memory_space<vmem>>, vector<1x1x256xf32>
    %14 = vector.shape_cast %13 : vector<1x1x256xf32> to vector<1x256xf32>
    %15 = vector.broadcast %14 : vector<1x256xf32> to vector<4x256xf32>
    %16 = arith.mulf %12, %15 : vector<4x256xf32>
    %c1_11 = arith.constant 1 : index
    %c0_12 = arith.constant 0 : index
    %c0_13 = arith.constant 0 : index
    %17 = vector.load %arg3[%c1_11, %c0_12, %c0_13] : memref<9x4x4xf32, #tpu.memory_space<vmem>>, vector<1x4x4xf32>
    %18 = vector.shape_cast %17 : vector<1x4x4xf32> to vector<4x4xf32>
    %cst_14 = arith.constant dense<0.000000e+00> : vector<4x256xf32>
    %19 = tpu.matmul %18, %16, %cst_14 {dimension_numbers = #tpu.dot_dimension_numbers<[1], [0], [0], [1], [0, 0, 1, 1], [], []>} : vector<4x4xf32>, vector<4x256xf32>, vector<4x256xf32> -> vector<4x256xf32>
    %20 = arith.addf %11, %19 : vector<4x256xf32>
    %c15_i32 = arith.constant 15 : i32
    %21 = tpu.dynamic_rotate %1 by %c15_i32 dim 1 : vector<4x256xf32>, i32 -> vector<4x256xf32>
    %c2 = arith.constant 2 : index
    %c0_15 = arith.constant 0 : index
    %c0_16 = arith.constant 0 : index
    %22 = vector.load %arg2[%c2, %c0_15, %c0_16] : memref<8x1x256xf32, #tpu.memory_space<vmem>>, vector<1x1x256xf32>
    %23 = vector.shape_cast %22 : vector<1x1x256xf32> to vector<1x256xf32>
    %24 = vector.broadcast %23 : vector<1x256xf32> to vector<4x256xf32>
    %25 = arith.mulf %21, %24 : vector<4x256xf32>
    %c2_17 = arith.constant 2 : index
    %c0_18 = arith.constant 0 : index
    %c0_19 = arith.constant 0 : index
    %26 = vector.load %arg3[%c2_17, %c0_18, %c0_19] : memref<9x4x4xf32, #tpu.memory_space<vmem>>, vector<1x4x4xf32>
    %27 = vector.shape_cast %26 : vector<1x4x4xf32> to vector<4x4xf32>
    %cst_20 = arith.constant dense<0.000000e+00> : vector<4x256xf32>
    %28 = tpu.matmul %27, %25, %cst_20 {dimension_numbers = #tpu.dot_dimension_numbers<[1], [0], [0], [1], [0, 0, 1, 1], [], []>} : vector<4x4xf32>, vector<4x256xf32>, vector<4x256xf32> -> vector<4x256xf32>
    %29 = arith.addf %20, %28 : vector<4x256xf32>
    %c1_i32 = arith.constant 1 : i32
    %30 = tpu.dynamic_rotate %1 by %c1_i32 dim 1 : vector<4x256xf32>, i32 -> vector<4x256xf32>
    %c3 = arith.constant 3 : index
    %c0_21 = arith.constant 0 : index
    %c0_22 = arith.constant 0 : index
    %31 = vector.load %arg2[%c3, %c0_21, %c0_22] : memref<8x1x256xf32, #tpu.memory_space<vmem>>, vector<1x1x256xf32>
    %32 = vector.shape_cast %31 : vector<1x1x256xf32> to vector<1x256xf32>
    %33 = vector.broadcast %32 : vector<1x256xf32> to vector<4x256xf32>
    %34 = arith.mulf %30, %33 : vector<4x256xf32>
    %c3_23 = arith.constant 3 : index
    %c0_24 = arith.constant 0 : index
    %c0_25 = arith.constant 0 : index
    %35 = vector.load %arg3[%c3_23, %c0_24, %c0_25] : memref<9x4x4xf32, #tpu.memory_space<vmem>>, vector<1x4x4xf32>
    %36 = vector.shape_cast %35 : vector<1x4x4xf32> to vector<4x4xf32>
    %cst_26 = arith.constant dense<0.000000e+00> : vector<4x256xf32>
    %37 = tpu.matmul %36, %34, %cst_26 {dimension_numbers = #tpu.dot_dimension_numbers<[1], [0], [0], [1], [0, 0, 1, 1], [], []>} : vector<4x4xf32>, vector<4x256xf32>, vector<4x256xf32> -> vector<4x256xf32>
    %38 = arith.addf %29, %37 : vector<4x256xf32>
    %c4 = arith.constant 4 : index
    %c0_27 = arith.constant 0 : index
    %c0_28 = arith.constant 0 : index
    %39 = vector.load %arg3[%c4, %c0_27, %c0_28] : memref<9x4x4xf32, #tpu.memory_space<vmem>>, vector<1x4x4xf32>
    %40 = vector.shape_cast %39 : vector<1x4x4xf32> to vector<4x4xf32>
    %cst_29 = arith.constant dense<0.000000e+00> : vector<4x256xf32>
    %41 = tpu.matmul %40, %1, %cst_29 {dimension_numbers = #tpu.dot_dimension_numbers<[1], [0], [0], [1], [0, 0, 1, 1], [], []>} : vector<4x4xf32>, vector<4x256xf32>, vector<4x256xf32> -> vector<4x256xf32>
    %42 = arith.addf %38, %41 : vector<4x256xf32>
    %c255_i32 = arith.constant 255 : i32
    %43 = tpu.dynamic_rotate %1 by %c255_i32 dim 1 : vector<4x256xf32>, i32 -> vector<4x256xf32>
    %c4_30 = arith.constant 4 : index
    %c0_31 = arith.constant 0 : index
    %c0_32 = arith.constant 0 : index
    %44 = vector.load %arg2[%c4_30, %c0_31, %c0_32] : memref<8x1x256xf32, #tpu.memory_space<vmem>>, vector<1x1x256xf32>
    %45 = vector.shape_cast %44 : vector<1x1x256xf32> to vector<1x256xf32>
    %46 = vector.broadcast %45 : vector<1x256xf32> to vector<4x256xf32>
    %47 = arith.mulf %43, %46 : vector<4x256xf32>
    %c5 = arith.constant 5 : index
    %c0_33 = arith.constant 0 : index
    %c0_34 = arith.constant 0 : index
    %48 = vector.load %arg3[%c5, %c0_33, %c0_34] : memref<9x4x4xf32, #tpu.memory_space<vmem>>, vector<1x4x4xf32>
    %49 = vector.shape_cast %48 : vector<1x4x4xf32> to vector<4x4xf32>
    %cst_35 = arith.constant dense<0.000000e+00> : vector<4x256xf32>
    %50 = tpu.matmul %49, %47, %cst_35 {dimension_numbers = #tpu.dot_dimension_numbers<[1], [0], [0], [1], [0, 0, 1, 1], [], []>} : vector<4x4xf32>, vector<4x256xf32>, vector<4x256xf32> -> vector<4x256xf32>
    %51 = arith.addf %42, %50 : vector<4x256xf32>
    %c241_i32 = arith.constant 241 : i32
    %52 = tpu.dynamic_rotate %1 by %c241_i32 dim 1 : vector<4x256xf32>, i32 -> vector<4x256xf32>
    %c5_36 = arith.constant 5 : index
    %c0_37 = arith.constant 0 : index
    %c0_38 = arith.constant 0 : index
    %53 = vector.load %arg2[%c5_36, %c0_37, %c0_38] : memref<8x1x256xf32, #tpu.memory_space<vmem>>, vector<1x1x256xf32>
    %54 = vector.shape_cast %53 : vector<1x1x256xf32> to vector<1x256xf32>
    %55 = vector.broadcast %54 : vector<1x256xf32> to vector<4x256xf32>
    %56 = arith.mulf %52, %55 : vector<4x256xf32>
    %c6 = arith.constant 6 : index
    %c0_39 = arith.constant 0 : index
    %c0_40 = arith.constant 0 : index
    %57 = vector.load %arg3[%c6, %c0_39, %c0_40] : memref<9x4x4xf32, #tpu.memory_space<vmem>>, vector<1x4x4xf32>
    %58 = vector.shape_cast %57 : vector<1x4x4xf32> to vector<4x4xf32>
    %cst_41 = arith.constant dense<0.000000e+00> : vector<4x256xf32>
    %59 = tpu.matmul %58, %56, %cst_41 {dimension_numbers = #tpu.dot_dimension_numbers<[1], [0], [0], [1], [0, 0, 1, 1], [], []>} : vector<4x4xf32>, vector<4x256xf32>, vector<4x256xf32> -> vector<4x256xf32>
    %60 = arith.addf %51, %59 : vector<4x256xf32>
    %c240_i32 = arith.constant 240 : i32
    %61 = tpu.dynamic_rotate %1 by %c240_i32 dim 1 : vector<4x256xf32>, i32 -> vector<4x256xf32>
    %c6_42 = arith.constant 6 : index
    %c0_43 = arith.constant 0 : index
    %c0_44 = arith.constant 0 : index
    %62 = vector.load %arg2[%c6_42, %c0_43, %c0_44] : memref<8x1x256xf32, #tpu.memory_space<vmem>>, vector<1x1x256xf32>
    %63 = vector.shape_cast %62 : vector<1x1x256xf32> to vector<1x256xf32>
    %64 = vector.broadcast %63 : vector<1x256xf32> to vector<4x256xf32>
    %65 = arith.mulf %61, %64 : vector<4x256xf32>
    %c7 = arith.constant 7 : index
    %c0_45 = arith.constant 0 : index
    %c0_46 = arith.constant 0 : index
    %66 = vector.load %arg3[%c7, %c0_45, %c0_46] : memref<9x4x4xf32, #tpu.memory_space<vmem>>, vector<1x4x4xf32>
    %67 = vector.shape_cast %66 : vector<1x4x4xf32> to vector<4x4xf32>
    %cst_47 = arith.constant dense<0.000000e+00> : vector<4x256xf32>
    %68 = tpu.matmul %67, %65, %cst_47 {dimension_numbers = #tpu.dot_dimension_numbers<[1], [0], [0], [1], [0, 0, 1, 1], [], []>} : vector<4x4xf32>, vector<4x256xf32>, vector<4x256xf32> -> vector<4x256xf32>
    %69 = arith.addf %60, %68 : vector<4x256xf32>
    %c239_i32 = arith.constant 239 : i32
    %70 = tpu.dynamic_rotate %1 by %c239_i32 dim 1 : vector<4x256xf32>, i32 -> vector<4x256xf32>
    %c7_48 = arith.constant 7 : index
    %c0_49 = arith.constant 0 : index
    %c0_50 = arith.constant 0 : index
    %71 = vector.load %arg2[%c7_48, %c0_49, %c0_50] : memref<8x1x256xf32, #tpu.memory_space<vmem>>, vector<1x1x256xf32>
    %72 = vector.shape_cast %71 : vector<1x1x256xf32> to vector<1x256xf32>
    %73 = vector.broadcast %72 : vector<1x256xf32> to vector<4x256xf32>
    %74 = arith.mulf %70, %73 : vector<4x256xf32>
    %c8 = arith.constant 8 : index
    %c0_51 = arith.constant 0 : index
    %c0_52 = arith.constant 0 : index
    %75 = vector.load %arg3[%c8, %c0_51, %c0_52] : memref<9x4x4xf32, #tpu.memory_space<vmem>>, vector<1x4x4xf32>
    %76 = vector.shape_cast %75 : vector<1x4x4xf32> to vector<4x4xf32>
    %cst_53 = arith.constant dense<0.000000e+00> : vector<4x256xf32>
    %77 = tpu.matmul %76, %74, %cst_53 {dimension_numbers = #tpu.dot_dimension_numbers<[1], [0], [0], [1], [0, 0, 1, 1], [], []>} : vector<4x4xf32>, vector<4x256xf32>, vector<4x256xf32> -> vector<4x256xf32>
    %78 = arith.addf %69, %77 : vector<4x256xf32>
    %cst_54 = arith.constant dense<0.000000e+00> : vector<4xf32>
    %79 = vector.multi_reduction <add>, %78, %cst_54 [1] : vector<4x256xf32> to vector<4xf32>
    %80 = vector.shape_cast %79 : vector<4xf32> to vector<4x1xf32>
    %cst_55 = arith.constant 2.560000e+02 : f32
    %81 = vector.broadcast %cst_55 : f32 to vector<4x1xf32>
    %82 = arith.divf %80, %81 : vector<4x1xf32>
    %83 = arith.mulf %78, %78 : vector<4x256xf32>
    %cst_56 = arith.constant dense<0.000000e+00> : vector<4xf32>
    %84 = vector.multi_reduction <add>, %83, %cst_56 [1] : vector<4x256xf32> to vector<4xf32>
    %85 = vector.shape_cast %84 : vector<4xf32> to vector<4x1xf32>
    %cst_57 = arith.constant 2.560000e+02 : f32
    %86 = vector.broadcast %cst_57 : f32 to vector<4x1xf32>
    %87 = arith.divf %85, %86 : vector<4x1xf32>
    %88 = arith.mulf %82, %82 : vector<4x1xf32>
    %89 = arith.subf %87, %88 : vector<4x1xf32>
    %90 = vector.broadcast %82 : vector<4x1xf32> to vector<4x256xf32>
    %91 = arith.subf %78, %90 : vector<4x256xf32>
    %cst_58 = arith.constant 9.99999974E-6 : f32
    %92 = vector.broadcast %cst_58 : f32 to vector<4x1xf32>
    %93 = arith.addf %89, %92 : vector<4x1xf32>
    %94 = math.rsqrt %93 : vector<4x1xf32>
    %95 = vector.broadcast %94 : vector<4x1xf32> to vector<4x256xf32>
    %96 = arith.mulf %91, %95 : vector<4x256xf32>
    %cst_59 = arith.constant 0.000000e+00 : f32
    %97 = vector.broadcast %cst_59 : f32 to vector<4x256xf32>
    %98 = arith.maximumf %96, %97 : vector<4x256xf32>
    %cst_60 = arith.constant 0.000000e+00 : f32
    %99 = vector.broadcast %cst_60 : f32 to vector<4x256xf32>
    %c17_i32_61 = arith.constant 17 : i32
    %100 = tpu.dynamic_rotate %98 by %c17_i32_61 dim 1 : vector<4x256xf32>, i32 -> vector<4x256xf32>
    %c0_62 = arith.constant 0 : index
    %c0_63 = arith.constant 0 : index
    %c0_64 = arith.constant 0 : index
    %101 = vector.load %arg2[%c0_62, %c0_63, %c0_64] : memref<8x1x256xf32, #tpu.memory_space<vmem>>, vector<1x1x256xf32>
    %102 = vector.shape_cast %101 : vector<1x1x256xf32> to vector<1x256xf32>
    %103 = vector.broadcast %102 : vector<1x256xf32> to vector<4x256xf32>
    %104 = arith.mulf %100, %103 : vector<4x256xf32>
    %c0_65 = arith.constant 0 : index
    %c0_66 = arith.constant 0 : index
    %c0_67 = arith.constant 0 : index
    %105 = vector.load %arg4[%c0_65, %c0_66, %c0_67] : memref<9x4x4xf32, #tpu.memory_space<vmem>>, vector<1x4x4xf32>
    %106 = vector.shape_cast %105 : vector<1x4x4xf32> to vector<4x4xf32>
    %cst_68 = arith.constant dense<0.000000e+00> : vector<4x256xf32>
    %107 = tpu.matmul %106, %104, %cst_68 {dimension_numbers = #tpu.dot_dimension_numbers<[1], [0], [0], [1], [0, 0, 1, 1], [], []>} : vector<4x4xf32>, vector<4x256xf32>, vector<4x256xf32> -> vector<4x256xf32>
    %108 = arith.addf %99, %107 : vector<4x256xf32>
    %c16_i32_69 = arith.constant 16 : i32
    %109 = tpu.dynamic_rotate %98 by %c16_i32_69 dim 1 : vector<4x256xf32>, i32 -> vector<4x256xf32>
    %c1_70 = arith.constant 1 : index
    %c0_71 = arith.constant 0 : index
    %c0_72 = arith.constant 0 : index
    %110 = vector.load %arg2[%c1_70, %c0_71, %c0_72] : memref<8x1x256xf32, #tpu.memory_space<vmem>>, vector<1x1x256xf32>
    %111 = vector.shape_cast %110 : vector<1x1x256xf32> to vector<1x256xf32>
    %112 = vector.broadcast %111 : vector<1x256xf32> to vector<4x256xf32>
    %113 = arith.mulf %109, %112 : vector<4x256xf32>
    %c1_73 = arith.constant 1 : index
    %c0_74 = arith.constant 0 : index
    %c0_75 = arith.constant 0 : index
    %114 = vector.load %arg4[%c1_73, %c0_74, %c0_75] : memref<9x4x4xf32, #tpu.memory_space<vmem>>, vector<1x4x4xf32>
    %115 = vector.shape_cast %114 : vector<1x4x4xf32> to vector<4x4xf32>
    %cst_76 = arith.constant dense<0.000000e+00> : vector<4x256xf32>
    %116 = tpu.matmul %115, %113, %cst_76 {dimension_numbers = #tpu.dot_dimension_numbers<[1], [0], [0], [1], [0, 0, 1, 1], [], []>} : vector<4x4xf32>, vector<4x256xf32>, vector<4x256xf32> -> vector<4x256xf32>
    %117 = arith.addf %108, %116 : vector<4x256xf32>
    %c15_i32_77 = arith.constant 15 : i32
    %118 = tpu.dynamic_rotate %98 by %c15_i32_77 dim 1 : vector<4x256xf32>, i32 -> vector<4x256xf32>
    %c2_78 = arith.constant 2 : index
    %c0_79 = arith.constant 0 : index
    %c0_80 = arith.constant 0 : index
    %119 = vector.load %arg2[%c2_78, %c0_79, %c0_80] : memref<8x1x256xf32, #tpu.memory_space<vmem>>, vector<1x1x256xf32>
    %120 = vector.shape_cast %119 : vector<1x1x256xf32> to vector<1x256xf32>
    %121 = vector.broadcast %120 : vector<1x256xf32> to vector<4x256xf32>
    %122 = arith.mulf %118, %121 : vector<4x256xf32>
    %c2_81 = arith.constant 2 : index
    %c0_82 = arith.constant 0 : index
    %c0_83 = arith.constant 0 : index
    %123 = vector.load %arg4[%c2_81, %c0_82, %c0_83] : memref<9x4x4xf32, #tpu.memory_space<vmem>>, vector<1x4x4xf32>
    %124 = vector.shape_cast %123 : vector<1x4x4xf32> to vector<4x4xf32>
    %cst_84 = arith.constant dense<0.000000e+00> : vector<4x256xf32>
    %125 = tpu.matmul %124, %122, %cst_84 {dimension_numbers = #tpu.dot_dimension_numbers<[1], [0], [0], [1], [0, 0, 1, 1], [], []>} : vector<4x4xf32>, vector<4x256xf32>, vector<4x256xf32> -> vector<4x256xf32>
    %126 = arith.addf %117, %125 : vector<4x256xf32>
    %c1_i32_85 = arith.constant 1 : i32
    %127 = tpu.dynamic_rotate %98 by %c1_i32_85 dim 1 : vector<4x256xf32>, i32 -> vector<4x256xf32>
    %c3_86 = arith.constant 3 : index
    %c0_87 = arith.constant 0 : index
    %c0_88 = arith.constant 0 : index
    %128 = vector.load %arg2[%c3_86, %c0_87, %c0_88] : memref<8x1x256xf32, #tpu.memory_space<vmem>>, vector<1x1x256xf32>
    %129 = vector.shape_cast %128 : vector<1x1x256xf32> to vector<1x256xf32>
    %130 = vector.broadcast %129 : vector<1x256xf32> to vector<4x256xf32>
    %131 = arith.mulf %127, %130 : vector<4x256xf32>
    %c3_89 = arith.constant 3 : index
    %c0_90 = arith.constant 0 : index
    %c0_91 = arith.constant 0 : index
    %132 = vector.load %arg4[%c3_89, %c0_90, %c0_91] : memref<9x4x4xf32, #tpu.memory_space<vmem>>, vector<1x4x4xf32>
    %133 = vector.shape_cast %132 : vector<1x4x4xf32> to vector<4x4xf32>
    %cst_92 = arith.constant dense<0.000000e+00> : vector<4x256xf32>
    %134 = tpu.matmul %133, %131, %cst_92 {dimension_numbers = #tpu.dot_dimension_numbers<[1], [0], [0], [1], [0, 0, 1, 1], [], []>} : vector<4x4xf32>, vector<4x256xf32>, vector<4x256xf32> -> vector<4x256xf32>
    %135 = arith.addf %126, %134 : vector<4x256xf32>
    %c4_93 = arith.constant 4 : index
    %c0_94 = arith.constant 0 : index
    %c0_95 = arith.constant 0 : index
    %136 = vector.load %arg4[%c4_93, %c0_94, %c0_95] : memref<9x4x4xf32, #tpu.memory_space<vmem>>, vector<1x4x4xf32>
    %137 = vector.shape_cast %136 : vector<1x4x4xf32> to vector<4x4xf32>
    %cst_96 = arith.constant dense<0.000000e+00> : vector<4x256xf32>
    %138 = tpu.matmul %137, %98, %cst_96 {dimension_numbers = #tpu.dot_dimension_numbers<[1], [0], [0], [1], [0, 0, 1, 1], [], []>} : vector<4x4xf32>, vector<4x256xf32>, vector<4x256xf32> -> vector<4x256xf32>
    %139 = arith.addf %135, %138 : vector<4x256xf32>
    %c255_i32_97 = arith.constant 255 : i32
    %140 = tpu.dynamic_rotate %98 by %c255_i32_97 dim 1 : vector<4x256xf32>, i32 -> vector<4x256xf32>
    %c4_98 = arith.constant 4 : index
    %c0_99 = arith.constant 0 : index
    %c0_100 = arith.constant 0 : index
    %141 = vector.load %arg2[%c4_98, %c0_99, %c0_100] : memref<8x1x256xf32, #tpu.memory_space<vmem>>, vector<1x1x256xf32>
    %142 = vector.shape_cast %141 : vector<1x1x256xf32> to vector<1x256xf32>
    %143 = vector.broadcast %142 : vector<1x256xf32> to vector<4x256xf32>
    %144 = arith.mulf %140, %143 : vector<4x256xf32>
    %c5_101 = arith.constant 5 : index
    %c0_102 = arith.constant 0 : index
    %c0_103 = arith.constant 0 : index
    %145 = vector.load %arg4[%c5_101, %c0_102, %c0_103] : memref<9x4x4xf32, #tpu.memory_space<vmem>>, vector<1x4x4xf32>
    %146 = vector.shape_cast %145 : vector<1x4x4xf32> to vector<4x4xf32>
    %cst_104 = arith.constant dense<0.000000e+00> : vector<4x256xf32>
    %147 = tpu.matmul %146, %144, %cst_104 {dimension_numbers = #tpu.dot_dimension_numbers<[1], [0], [0], [1], [0, 0, 1, 1], [], []>} : vector<4x4xf32>, vector<4x256xf32>, vector<4x256xf32> -> vector<4x256xf32>
    %148 = arith.addf %139, %147 : vector<4x256xf32>
    %c241_i32_105 = arith.constant 241 : i32
    %149 = tpu.dynamic_rotate %98 by %c241_i32_105 dim 1 : vector<4x256xf32>, i32 -> vector<4x256xf32>
    %c5_106 = arith.constant 5 : index
    %c0_107 = arith.constant 0 : index
    %c0_108 = arith.constant 0 : index
    %150 = vector.load %arg2[%c5_106, %c0_107, %c0_108] : memref<8x1x256xf32, #tpu.memory_space<vmem>>, vector<1x1x256xf32>
    %151 = vector.shape_cast %150 : vector<1x1x256xf32> to vector<1x256xf32>
    %152 = vector.broadcast %151 : vector<1x256xf32> to vector<4x256xf32>
    %153 = arith.mulf %149, %152 : vector<4x256xf32>
    %c6_109 = arith.constant 6 : index
    %c0_110 = arith.constant 0 : index
    %c0_111 = arith.constant 0 : index
    %154 = vector.load %arg4[%c6_109, %c0_110, %c0_111] : memref<9x4x4xf32, #tpu.memory_space<vmem>>, vector<1x4x4xf32>
    %155 = vector.shape_cast %154 : vector<1x4x4xf32> to vector<4x4xf32>
    %cst_112 = arith.constant dense<0.000000e+00> : vector<4x256xf32>
    %156 = tpu.matmul %155, %153, %cst_112 {dimension_numbers = #tpu.dot_dimension_numbers<[1], [0], [0], [1], [0, 0, 1, 1], [], []>} : vector<4x4xf32>, vector<4x256xf32>, vector<4x256xf32> -> vector<4x256xf32>
    %157 = arith.addf %148, %156 : vector<4x256xf32>
    %c240_i32_113 = arith.constant 240 : i32
    %158 = tpu.dynamic_rotate %98 by %c240_i32_113 dim 1 : vector<4x256xf32>, i32 -> vector<4x256xf32>
    %c6_114 = arith.constant 6 : index
    %c0_115 = arith.constant 0 : index
    %c0_116 = arith.constant 0 : index
    %159 = vector.load %arg2[%c6_114, %c0_115, %c0_116] : memref<8x1x256xf32, #tpu.memory_space<vmem>>, vector<1x1x256xf32>
    %160 = vector.shape_cast %159 : vector<1x1x256xf32> to vector<1x256xf32>
    %161 = vector.broadcast %160 : vector<1x256xf32> to vector<4x256xf32>
    %162 = arith.mulf %158, %161 : vector<4x256xf32>
    %c7_117 = arith.constant 7 : index
    %c0_118 = arith.constant 0 : index
    %c0_119 = arith.constant 0 : index
    %163 = vector.load %arg4[%c7_117, %c0_118, %c0_119] : memref<9x4x4xf32, #tpu.memory_space<vmem>>, vector<1x4x4xf32>
    %164 = vector.shape_cast %163 : vector<1x4x4xf32> to vector<4x4xf32>
    %cst_120 = arith.constant dense<0.000000e+00> : vector<4x256xf32>
    %165 = tpu.matmul %164, %162, %cst_120 {dimension_numbers = #tpu.dot_dimension_numbers<[1], [0], [0], [1], [0, 0, 1, 1], [], []>} : vector<4x4xf32>, vector<4x256xf32>, vector<4x256xf32> -> vector<4x256xf32>
    %166 = arith.addf %157, %165 : vector<4x256xf32>
    %c239_i32_121 = arith.constant 239 : i32
    %167 = tpu.dynamic_rotate %98 by %c239_i32_121 dim 1 : vector<4x256xf32>, i32 -> vector<4x256xf32>
    %c7_122 = arith.constant 7 : index
    %c0_123 = arith.constant 0 : index
    %c0_124 = arith.constant 0 : index
    %168 = vector.load %arg2[%c7_122, %c0_123, %c0_124] : memref<8x1x256xf32, #tpu.memory_space<vmem>>, vector<1x1x256xf32>
    %169 = vector.shape_cast %168 : vector<1x1x256xf32> to vector<1x256xf32>
    %170 = vector.broadcast %169 : vector<1x256xf32> to vector<4x256xf32>
    %171 = arith.mulf %167, %170 : vector<4x256xf32>
    %c8_125 = arith.constant 8 : index
    %c0_126 = arith.constant 0 : index
    %c0_127 = arith.constant 0 : index
    %172 = vector.load %arg4[%c8_125, %c0_126, %c0_127] : memref<9x4x4xf32, #tpu.memory_space<vmem>>, vector<1x4x4xf32>
    %173 = vector.shape_cast %172 : vector<1x4x4xf32> to vector<4x4xf32>
    %cst_128 = arith.constant dense<0.000000e+00> : vector<4x256xf32>
    %174 = tpu.matmul %173, %171, %cst_128 {dimension_numbers = #tpu.dot_dimension_numbers<[1], [0], [0], [1], [0, 0, 1, 1], [], []>} : vector<4x4xf32>, vector<4x256xf32>, vector<4x256xf32> -> vector<4x256xf32>
    %175 = arith.addf %166, %174 : vector<4x256xf32>
    %cst_129 = arith.constant dense<0.000000e+00> : vector<4xf32>
    %176 = vector.multi_reduction <add>, %175, %cst_129 [1] : vector<4x256xf32> to vector<4xf32>
    %177 = vector.shape_cast %176 : vector<4xf32> to vector<4x1xf32>
    %cst_130 = arith.constant 2.560000e+02 : f32
    %178 = vector.broadcast %cst_130 : f32 to vector<4x1xf32>
    %179 = arith.divf %177, %178 : vector<4x1xf32>
    %180 = arith.mulf %175, %175 : vector<4x256xf32>
    %cst_131 = arith.constant dense<0.000000e+00> : vector<4xf32>
    %181 = vector.multi_reduction <add>, %180, %cst_131 [1] : vector<4x256xf32> to vector<4xf32>
    %182 = vector.shape_cast %181 : vector<4xf32> to vector<4x1xf32>
    %cst_132 = arith.constant 2.560000e+02 : f32
    %183 = vector.broadcast %cst_132 : f32 to vector<4x1xf32>
    %184 = arith.divf %182, %183 : vector<4x1xf32>
    %185 = arith.mulf %179, %179 : vector<4x1xf32>
    %186 = arith.subf %184, %185 : vector<4x1xf32>
    %187 = vector.broadcast %179 : vector<4x1xf32> to vector<4x256xf32>
    %188 = arith.subf %175, %187 : vector<4x256xf32>
    %cst_133 = arith.constant 9.99999974E-6 : f32
    %189 = vector.broadcast %cst_133 : f32 to vector<4x1xf32>
    %190 = arith.addf %186, %189 : vector<4x1xf32>
    %191 = math.rsqrt %190 : vector<4x1xf32>
    %192 = vector.broadcast %191 : vector<4x1xf32> to vector<4x256xf32>
    %193 = arith.mulf %188, %192 : vector<4x256xf32>
    %194 = arith.addf %193, %1 : vector<4x256xf32>
    %c0_134 = arith.constant 0 : index
    %c0_135 = arith.constant 0 : index
    %c0_136 = arith.constant 0 : index
    %195 = vector.load %arg5[%c0_134, %c0_135, %c0_136] : memref<1x4x256xf32, #tpu.memory_space<vmem>>, vector<1x4x256xf32>
    %196 = vector.shape_cast %195 : vector<1x4x256xf32> to vector<4x256xf32>
    %197 = vector.shape_cast %194 : vector<4x256xf32> to vector<1x4x256xf32>
    tpu.vector_store %arg5[%c0_134, %c0_135, %c0_136], %197 {strides = array<i32>} : memref<1x4x256xf32, #tpu.memory_space<vmem>>, vector<1x4x256xf32>,
    return
  }
  func.func @transform_0(%arg0: i32) -> (i32, i32, i32) {
    %c0_i32 = arith.constant 0 : i32
    %c0_i32_0 = arith.constant 0 : i32
    %c0_i32_1 = arith.constant 0 : i32
    return %arg0, %c0_i32, %c0_i32_0 : i32, i32, i32
  }
  func.func @transform_1(%arg0: i32) -> (i32, i32, i32) {
    %c0_i32 = arith.constant 0 : i32
    %c0_i32_0 = arith.constant 0 : i32
    %c0_i32_1 = arith.constant 0 : i32
    %c0_i32_2 = arith.constant 0 : i32
    return %c0_i32, %c0_i32_0, %c0_i32_1 : i32, i32, i32
  }
  func.func @transform_2(%arg0: i32) -> (i32, i32, i32) {
    %c0_i32 = arith.constant 0 : i32
    %c0_i32_0 = arith.constant 0 : i32
    %c0_i32_1 = arith.constant 0 : i32
    %c0_i32_2 = arith.constant 0 : i32
    return %c0_i32, %c0_i32_0, %c0_i32_1 : i32, i32, i32
  }
  func.func @transform_3(%arg0: i32) -> (i32, i32, i32) {
    %c0_i32 = arith.constant 0 : i32
    %c0_i32_0 = arith.constant 0 : i32
    %c0_i32_1 = arith.constant 0 : i32
    %c0_i32_2 = arith.constant 0 : i32
    return %c0_i32, %c0_i32_0, %c0_i32_1 : i32, i32, i32
  }
  func.func @transform_4(%arg0: i32) -> (i32, i32, i32) {
    %c0_i32 = arith.constant 0 : i32
    %c0_i32_0 = arith.constant 0 : i32
    %c0_i32_1 = arith.constant 0 : i32
    return %arg0, %c0_i32, %c0_i32_0 : i32, i32, i32
  }
}

</mosaic_0001>

<llo_original>
// kernel: resblock_pallas.1
$region0: #{resblock_pallas.1}
  #allocation0 [shape = 'u32[]', space=smem, size = 0x4, offset = 0x4, fixed_abs, tag = 'smem constant byte address 0x4 - core index']
  #allocation1 [shape = 'u32[144,128]{1,0:T(1,128)}', space=vmem, size = 0x12000, scoped, tag = 'internal scratch']
  %s0 = inlined_call_operand.vmem [shape: f32[2,4,256], index: 0, kind: input, shape index: {}]
  %s1 = inlined_call_operand.vmem [shape: f32[8,1,256], index: 1, kind: input, shape index: {}]
  %s2 = inlined_call_operand.vmem [shape: f32[9,4,4], index: 2, kind: input, shape index: {}]
  %s3 = inlined_call_operand.vmem [shape: f32[9,4,4], index: 3, kind: input, shape index: {}]
  %s4 = inlined_call_operand.vmem [shape: f32[2,4,256], index: 4, kind: output, shape index: {}]
  %s5 = sld [smem:[#allocation0]]
  $region49: #{resblock_pallas.1} parent=0
    _
  %s7 = ssub.s32 1, %s5
  %s8 = scalar_select 0, %s7, %s5
  loop: start=0, step=1, limit=4
  $region2: #{resblock_pallas.1} parent=0 // loop_pre_header
    _
  $region3: #{resblock_pallas.1} parent=0 // loop_header
    %s10 = sphi 0, %s14
    %p11 = scmp.ge.s32.totalorder %s10, 4
    %s20 = sphi 0, %s22
    %s23 = sphi 0, %s20
    %s24 = sphi 0, %s23
    %s40 = sphi 0, %s24
    %s44 = sphi 0, %s44
    %s46 = sphi 0, %s44
    %s47 = sphi 0, %s46
    %s61 = sphi 0, %s47
    %s65 = sphi 0, %s65
    %s67 = sphi 0, %s65
    %s68 = sphi 0, %s67
    %s82 = sphi 0, %s68
    %s86 = sphi 0, %s86
    %s88 = sphi 0, %s86
    %s89 = sphi 0, %s88
    %s103 = sphi 0, %s89
    %s109 = sphi 0, %s111
    %s112 = sphi 0, %s109
    %s113 = sphi 0, %s112
    %s129 = sphi 0, %s113
  $region4: #{resblock_pallas.1} parent=0 // loop_header_branch
    %13 = sbr.rel (%p11) target = $region8
  $region5: #{resblock_pallas.1} parent=0 // loop_body
    %s15 = ssub.s32 %s10, 1
    %s16 = ssub.s32 %s10, 2
    %s17 = sadd.s32 %s10, 1
    %s18 = ssub.s32 %s10, %s17
    %p19 = scmp.eq.s32.totalorder %s18, 0
    %s21 = sadd.s32 %s20, 1
    %s22 = scalar_select %p19, %s20, %s21
    %p25 = pneg %p19
    %p26 = scmp.eq.s32.totalorder %s10, 1
    %p27 = por %p25, %p26
    %p28 = scmp.ne.s32.totalorder %s20, %s23
    %p29 = scmp.eq.s32.totalorder %s10, 0
    %p30 = por %p28, %p29
    %p31 = scmp.ne.s32.totalorder %s20, %s23
    %p32 = scmp.eq.s32.totalorder %s15, 1
    %p33 = por %p31, %p32
    %p34 = scmp.ne.s32.totalorder %s23, %s24
    %p35 = scmp.eq.s32.totalorder %s15, 0
    %p36 = por %p34, %p35
    %p37 = scmp.ne.s32.totalorder %s23, %s24
    %p38 = scmp.eq.s32.totalorder %s16, 1
    %p39 = por %p37, %p38
    %p41 = scmp.ne.s32.totalorder %s24, %s40
    %p42 = scmp.eq.s32.totalorder %s16, 0
    %p43 = por %p41, %p42
    %s45 = sadd.s32 %s44, 1
    %p48 = scmp.eq.s32.totalorder %s10, 1
    %p49 = scmp.ne.s32.totalorder %s44, %s46
    %p50 = scmp.eq.s32.totalorder %s10, 0
    %p51 = por %p49, %p50
    %p52 = scmp.ne.s32.totalorder %s44, %s46
    %p53 = scmp.eq.s32.totalorder %s15, 1
    %p54 = por %p52, %p53
    %p55 = scmp.ne.s32.totalorder %s46, %s47
    %p56 = scmp.eq.s32.totalorder %s15, 0
    %p57 = por %p55, %p56
    %p58 = scmp.ne.s32.totalorder %s46, %s47
    %p59 = scmp.eq.s32.totalorder %s16, 1
    %p60 = por %p58, %p59
    %p62 = scmp.ne.s32.totalorder %s47, %s61
    %p63 = scmp.eq.s32.totalorder %s16, 0
    %p64 = por %p62, %p63
    %s66 = sadd.s32 %s65, 1
    %p69 = scmp.eq.s32.totalorder %s10, 1
    %p70 = scmp.ne.s32.totalorder %s65, %s67
    %p71 = scmp.eq.s32.totalorder %s10, 0
    %p72 = por %p70, %p71
    %p73 = scmp.ne.s32.totalorder %s65, %s67
    %p74 = scmp.eq.s32.totalorder %s15, 1
    %p75 = por %p73, %p74
    %p76 = scmp.ne.s32.totalorder %s67, %s68
    %p77 = scmp.eq.s32.totalorder %s15, 0
    %p78 = por %p76, %p77
    %p79 = scmp.ne.s32.totalorder %s67, %s68
    %p80 = scmp.eq.s32.totalorder %s16, 1
    %p81 = por %p79, %p80
    %p83 = scmp.ne.s32.totalorder %s68, %s82
    %p84 = scmp.eq.s32.totalorder %s16, 0
    %p85 = por %p83, %p84
    %s87 = sadd.s32 %s86, 1
    %p90 = scmp.eq.s32.totalorder %s10, 1
    %p91 = scmp.ne.s32.totalorder %s86, %s88
    %p92 = scmp.eq.s32.totalorder %s10, 0
    %p93 = por %p91, %p92
    %p94 = scmp.ne.s32.totalorder %s86, %s88
    %p95 = scmp.eq.s32.totalorder %s15, 1
    %p96 = por %p94, %p95
    %p97 = scmp.ne.s32.totalorder %s88, %s89
    %p98 = scmp.eq.s32.totalorder %s15, 0
    %p99 = por %p97, %p98
    %p100 = scmp.ne.s32.totalorder %s88, %s89
    %p101 = scmp.eq.s32.totalorder %s16, 1
    %p102 = por %p100, %p101
    %p104 = scmp.ne.s32.totalorder %s89, %s103
    %p105 = scmp.eq.s32.totalorder %s16, 0
    %p106 = por %p104, %p105
    %s107 = ssub.s32 %s10, %s17
    %p108 = scmp.eq.s32.totalorder %s107, 0
    %s110 = sadd.s32 %s109, 1
    %s111 = scalar_select %p108, %s109, %s110
    %p114 = pneg %p108
    %p115 = scmp.eq.s32.totalorder %s10, 1
    %p116 = por %p114, %p115
    %p117 = scmp.ne.s32.totalorder %s109, %s112
    %p118 = scmp.eq.s32.totalorder %s10, 0
    %p119 = por %p117, %p118
    %p120 = scmp.ne.s32.totalorder %s109, %s112
    %p121 = scmp.eq.s32.totalorder %s15, 1
    %p122 = por %p120, %p121
    %p123 = scmp.ne.s32.totalorder %s112, %s113
    %p124 = scmp.eq.s32.totalorder %s15, 0
    %p125 = por %p123, %p124
    %p126 = scmp.ne.s32.totalorder %s112, %s113
    %p127 = scmp.eq.s32.totalorder %s16, 1
    %p128 = por %p126, %p127
    %p130 = scmp.ne.s32.totalorder %s113, %s129
    %p131 = scmp.eq.s32.totalorder %s16, 0
    %p132 = por %p130, %p131
    %p133 = scmp.le.s32.totalorder 1, %s10
    %p134 = scmp.lt.s32.totalorder %s10, 3
    %p135 = pnand %p133, %p134
    %p136 = pneg %p135
    // Predicated region
    $region9: #{resblock_pallas.1} parent=5 // pred_check
      _
    $region10: #{resblock_pallas.1} parent=5 // pred_check_branch
      %138 = sbr.rel (%p135) target = $region12
    $region11: #{resblock_pallas.1} parent=5 // pred_region
      %s139 = ssub.s32 %s10, 1
      // Predicated region
      $region13: #{resblock_pallas.1} parent=11 // pred_check
        %p140 = pneg %p57
      $region14: #{resblock_pallas.1} parent=11 // pred_check_branch
        %142 = sbr.rel (%p140) target = $region16
      $region15: #{resblock_pallas.1} parent=11 // pred_region
        _
      $region16: #{resblock_pallas.1} parent=11 // pred_fallthru
        _
      // Predicated region
      $region17: #{resblock_pallas.1} parent=11 // pred_check
        %p143 = pneg %p78
      $region18: #{resblock_pallas.1} parent=11 // pred_check_branch
        %145 = sbr.rel (%p143) target = $region20
      $region19: #{resblock_pallas.1} parent=11 // pred_region
        _
      $region20: #{resblock_pallas.1} parent=11 // pred_fallthru
        _
      // Predicated region
      $region21: #{resblock_pallas.1} parent=11 // pred_check
        %p146 = pneg %p99
      $region22: #{resblock_pallas.1} parent=11 // pred_check_branch
        %148 = sbr.rel (%p146) target = $region24
      $region23: #{resblock_pallas.1} parent=11 // pred_region
        _
      $region24: #{resblock_pallas.1} parent=11 // pred_fallthru
        _
    $region12: #{resblock_pallas.1} parent=5 // pred_fallthru
      _
    %p149 = scmp.lt.s32.totalorder %s10, 2
    // Predicated region
    $region25: #{resblock_pallas.1} parent=5 // pred_check
      %p150 = pneg %p149
    $region26: #{resblock_pallas.1} parent=5 // pred_check_branch
      %152 = sbr.rel (%p150) target = $region28
    $region27: #{resblock_pallas.1} parent=5 // pred_region
      // Predicated region
      $region29: #{resblock_pallas.1} parent=27 // pred_check
        %p153 = pneg %p30
      $region30: #{resblock_pallas.1} parent=27 // pred_check_branch
        %155 = sbr.rel (%p153) target = $region32
      $region31: #{resblock_pallas.1} parent=27 // pred_region
        %p156 = scmp.lt.s32.totalorder %s10, 1
        %s157 = scalar_select %p156, %s10, 1
        %s158 = smul.addr %s157, 2
        %s159 = smul.addr %s158, 4
        %s160 = scalar_lea.vmem %s0, %s159
      $region32: #{resblock_pallas.1} parent=27 // pred_fallthru
        _
    $region28: #{resblock_pallas.1} parent=5 // pred_fallthru
      _
    %p161 = scmp.le.s32.totalorder 1, %s10
    %p162 = scmp.lt.s32.totalorder %s10, 3
    %p163 = pnand %p161, %p162
    %p164 = pneg %p163
    // Predicated region
    $region33: #{resblock_pallas.1} parent=5 // pred_check
      _
    $region34: #{resblock_pallas.1} parent=5 // pred_check_branch
      %166 = sbr.rel (%p163) target = $region36
    $region35: #{resblock_pallas.1} parent=5 // pred_region
      %s167 = ssub.s32 %s10, 1
      %p168 = scmp.lt.s32.totalorder %s15, 1
      %s169 = scalar_select %p168, %s15, 1
      %s170 = smul.addr %s169, 2
      %s171 = smul.addr %s170, 4
      %s172 = scalar_lea.vmem %s0, %s171
      %p173 = pneg %p36
      %p174 = pneg %p33
      %p175 = pneg %p57
      %p176 = pneg %p54
      %p177 = pneg %p78
      %p178 = pneg %p75
      %p179 = pneg %p99
      %p180 = pneg %p96
      %p181 = pneg %p125
      %p182 = pneg %p122
      %p183 = scmp.lt.s32.totalorder %s15, 1
      %s184 = scalar_select %p183, %s15, 1
      %s185 = smul.addr %s184, 2
      %s186 = smul.addr %s185, 4
      %s187 = scalar_lea.vmem %s4, %s186
      %p188 = scmp.lt.s32.totalorder %s15, 1
      %s189 = scalar_select %p188, %s15, 1
      %s190 = smul.addr %s189, 2
      %s191 = smul.addr %s190, 4
      %s192 = scalar_lea.vmem %s0, %s191
      %p193 = scmp.lt.s32.totalorder %s15, 1
      %s194 = scalar_select %p193, %s15, 1
      %s195 = smul.addr %s194, 2
      %s196 = smul.addr %s195, 4
      %s197 = scalar_lea.vmem %s4, %s196
      %v198 = vld [vmem:[%s192] sm:$0xff]
      %v200 = vcombine.high %v198, %v198
      %202 = vrot.lane.b32.xlu0 %v198, 17
      %v203 = vpop.permute.xlu0 %202
      %204 = vrot.lane.b32.xlu0 %v200, 17
      %v205 = vpop.permute.xlu0 %204
      %v206 = vlaneseq
      %v207 = vand.u32 %v206, 127
      %vm208 = vcmp.lt.s32.totalorder %v207, 17
      %v209 = vsel %vm208, %v203, %v205
      %v210 = vsel %vm208, %v205, %v203
      %v211 = vld [vmem:[%s1] sm:$0x3]
      %v213 = vlaneseq
      %v214 = vshrl.u32 %v213, 7
      %v215 = vsub.s32 0, %v214
      %v216 = vrot.slane %v211, %v215
      %v217 = vlaneseq
      %v218 = vshrl.u32 %v217, 7
      %v219 = vsub.s32 1, %v218
      %v220 = vrot.slane %v211, %v219
      %v223 = vmul.f32 %v210, %v216
      %v224 = vmul.f32 %v209, %v220
      %v225 = vld [vmem:[%s2] sm:$0xf]
      %226 = vrot.lane.b32.xlu0 %v198, 16
      %v227 = vpop.permute.xlu0 %226
      %228 = vrot.lane.b32.xlu0 %v200, 16
      %v229 = vpop.permute.xlu0 %228
      %vm230 = vcmp.lt.s32.totalorder %v207, 16
      %v231 = vsel %vm230, %v227, %v229
      %v232 = vsel %vm230, %v229, %v227
      %s233 = scalar_lea.vmem %s1, 2
      %v234 = vld [vmem:[%s233] sm:$0x3]
      %v236 = vlaneseq
      %v237 = vshrl.u32 %v236, 7
      %v238 = vsub.s32 0, %v237
      %v239 = vrot.slane %v234, %v238
      %v240 = vlaneseq
      %v241 = vshrl.u32 %v240, 7
      %v242 = vsub.s32 1, %v241
      %v243 = vrot.slane %v234, %v242
      %v246 = vmul.f32 %v232, %v239
      %v247 = vmul.f32 %v231, %v243
      %s248 = scalar_lea.vmem %s2, 4
      %v249 = vld [vmem:[%s248] sm:$0xf]
      %vm250 = vcmask 31744
      %v252 = vsel %vm250, %v249, 0
      %vm254 = vcmask 1043456
      %v256 = vsel %vm254, %v246, 0
      %v259 = vsel %vm254, %v247, 0
      %261 = vmatprep.subr.mxu0 %v259
      %262 = vmatpush1.msra.mxu0 %v256
      %263 = vmatprep.subr.mxu0 0.0
      %264 = vmatpush1.msra.mxu0 0.0
      %265 = vmatprep.subr.mxu0 0.0
      %266 = vmatpush1.msra.mxu0 0.0
      %267 = vmatprep.subr.mxu0 0.0
      %268 = vmatpush1.msra.mxu0 0.0
      %269 = vmatprep.subr.mxu0 0.0
      %270 = vmatpush1.msra.mxu0 0.0
      %271 = vmatprep.subr.mxu0 0.0
      %272 = vmatpush1.msra.mxu0 0.0
      %273 = vmatprep.subr.mxu0 0.0
      %274 = vmatpush1.msra.mxu0 0.0
      %275 = vmatprep.subr.mxu0 0.0
      %276 = vmatpush1.msra.mxu0 0.0
      %277 = vmatprep.subr.mxu0 0.0
      %278 = vmatpush1.msra.mxu0 0.0
      %279 = vmatprep.subr.mxu0 0.0
      %280 = vmatpush1.msra.mxu0 0.0
      %281 = vmatprep.subr.mxu0 0.0
      %282 = vmatpush1.msra.mxu0 0.0
      %283 = vmatprep.subr.mxu0 0.0
      %284 = vmatpush1.msra.mxu0 0.0
      %285 = vmatprep.subr.mxu0 0.0
      %286 = vmatpush1.msra.mxu0 0.0
      %287 = vmatprep.subr.mxu0 0.0
      %288 = vmatpush1.msra.mxu0 0.0
      %289 = vmatprep.subr.mxu0 0.0
      %290 = vmatpush1.msra.mxu0 0.0
      %291 = vmatprep.subr.mxu0 0.0
      %292 = vmatpush1.msra.mxu0 0.0
      %293 = vmatprep.subr.mxu0 0.0
      %294 = vmatpush1.msra.mxu0 0.0
      %295 = vmatprep.subr.mxu0 0.0
      %296 = vmatpush1.msra.mxu0 0.0
      %297 = vmatprep.subr.mxu0 0.0
      %298 = vmatpush1.msra.mxu0 0.0
      %299 = vmatprep.subr.mxu0 0.0
      %300 = vmatpush1.msra.mxu0 0.0
      %301 = vmatprep.subr.mxu0 0.0
      %302 = vmatpush1.msra.mxu0 0.0
      %303 = vmatprep.subr.mxu0 0.0
      %304 = vmatpush1.msra.mxu0 0.0
      %305 = vmatprep.subr.mxu0 0.0
      %306 = vmatpush1.msra.mxu0 0.0
      %307 = vmatprep.subr.mxu0 0.0
      %308 = vmatpush1.msra.mxu0 0.0
      %309 = vmatprep.subr.mxu0 0.0
      %310 = vmatpush1.msra.mxu0 0.0
      %311 = vmatprep.subr.mxu0 0.0
      %312 = vmatpush1.msra.mxu0 0.0
      %313 = vmatprep.subr.mxu0 0.0
      %314 = vmatpush1.msra.mxu0 0.0
      %315 = vmatprep.subr.mxu0 0.0
      %316 = vmatpush1.msra.mxu0 0.0
      %317 = vmatprep.subr.mxu0 0.0
      %318 = vmatpush1.msra.mxu0 0.0
      %319 = vmatprep.subr.mxu0 0.0
      %320 = vmatpush1.msra.mxu0 0.0
      %321 = vmatprep.subr.mxu0 0.0
      %322 = vmatpush1.msra.mxu0 0.0
      %323 = vmatprep.subr.mxu0 0.0
      %324 = vmatpush1.msra.mxu0 0.0
      %325 = vmatprep.mubr.f32.mxu0 0.0
      %326 = vmatmul.mubr.f32.gmra.mrb[0].mxu0 %v252
      %v327 = vpop.f32.mrb[0].mxu0
      %v328 = vadd.f32 0.0, %v327
      %v329 = vpop.f32.mrb[0].mxu0
      %v330 = vadd.f32 0.0, %v329
      %331 = vdwg.mxu0
      %v333 = vsel %vm250, %v225, 0
      %v336 = vsel %vm254, %v223, 0
      %v339 = vsel %vm254, %v224, 0
      %341 = vmatprep.subr.mxu0 %v339
      %342 = vmatpush1.msra.mxu0 %v336
      %343 = vmatprep.subr.mxu0 0.0
      %344 = vmatpush1.msra.mxu0 0.0
      %345 = vmatprep.subr.mxu0 0.0
      %346 = vmatpush1.msra.mxu0 0.0
      %347 = vmatprep.subr.mxu0 0.0
      %348 = vmatpush1.msra.mxu0 0.0
      %349 = vmatprep.subr.mxu0 0.0
      %350 = vmatpush1.msra.mxu0 0.0
      %351 = vmatprep.subr.mxu0 0.0
      %352 = vmatpush1.msra.mxu0 0.0
      %353 = vmatprep.subr.mxu0 0.0
      %354 = vmatpush1.msra.mxu0 0.0
      %355 = vmatprep.subr.mxu0 0.0
      %356 = vmatpush1.msra.mxu0 0.0
      %357 = vmatprep.subr.mxu0 0.0
      %358 = vmatpush1.msra.mxu0 0.0
      %359 = vmatprep.subr.mxu0 0.0
      %360 = vmatpush1.msra.mxu0 0.0
      %361 = vmatprep.subr.mxu0 0.0
      %362 = vmatpush1.msra.mxu0 0.0
      %363 = vmatprep.subr.mxu0 0.0
      %364 = vmatpush1.msra.mxu0 0.0
      %365 = vmatprep.subr.mxu0 0.0
      %366 = vmatpush1.msra.mxu0 0.0
      %367 = vmatprep.subr.mxu0 0.0
      %368 = vmatpush1.msra.mxu0 0.0
      %369 = vmatprep.subr.mxu0 0.0
      %370 = vmatpush1.msra.mxu0 0.0
      %371 = vmatprep.subr.mxu0 0.0
      %372 = vmatpush1.msra.mxu0 0.0
      %373 = vmatprep.subr.mxu0 0.0
      %374 = vmatpush1.msra.mxu0 0.0
      %375 = vmatprep.subr.mxu0 0.0
      %376 = vmatpush1.msra.mxu0 0.0
      %377 = vmatprep.subr.mxu0 0.0
      %378 = vmatpush1.msra.mxu0 0.0
      %379 = vmatprep.subr.mxu0 0.0
      %380 = vmatpush1.msra.mxu0 0.0
      %381 = vmatprep.subr.mxu0 0.0
      %382 = vmatpush1.msra.mxu0 0.0
      %383 = vmatprep.subr.mxu0 0.0
      %384 = vmatpush1.msra.mxu0 0.0
      %385 = vmatprep.subr.mxu0 0.0
      %386 = vmatpush1.msra.mxu0 0.0
      %387 = vmatprep.subr.mxu0 0.0
      %388 = vmatpush1.msra.mxu0 0.0
      %389 = vmatprep.subr.mxu0 0.0
      %390 = vmatpush1.msra.mxu0 0.0
      %391 = vmatprep.subr.mxu0 0.0
      %392 = vmatpush1.msra.mxu0 0.0
      %393 = vmatprep.subr.mxu0 0.0
      %394 = vmatpush1.msra.mxu0 0.0
      %395 = vmatprep.subr.mxu0 0.0
      %396 = vmatpush1.msra.mxu0 0.0
      %397 = vmatprep.subr.mxu0 0.0
      %398 = vmatpush1.msra.mxu0 0.0
      %399 = vmatprep.subr.mxu0 0.0
      %400 = vmatpush1.msra.mxu0 0.0
      %401 = vmatprep.subr.mxu0 0.0
      %402 = vmatpush1.msra.mxu0 0.0
      %403 = vmatprep.subr.mxu0 0.0
      %404 = vmatpush1.msra.mxu0 0.0
      %405 = vmatprep.mubr.f32.mxu0 0.0
      %406 = vmatmul.mubr.f32.gmra.mrb[0].mxu0 %v333
      %v407 = vpop.f32.mrb[0].mxu0
      %v408 = vadd.f32 %v328, %v407
      %v409 = vpop.f32.mrb[0].mxu0
      %v410 = vadd.f32 %v330, %v409
      %411 = vdwg.mxu0
      %412 = vrot.lane.b32.xlu0 %v198, 15
      %v413 = vpop.permute.xlu0 %412
      %414 = vrot.lane.b32.xlu0 %v200, 15
      %v415 = vpop.permute.xlu0 %414
      %vm416 = vcmp.lt.s32.totalorder %v207, 15
      %v417 = vsel %vm416, %v413, %v415
      %v418 = vsel %vm416, %v415, %v413
      %s419 = scalar_lea.vmem %s1, 4
      %v420 = vld [vmem:[%s419] sm:$0x3]
      %v422 = vlaneseq
      %v423 = vshrl.u32 %v422, 7
      %v424 = vsub.s32 0, %v423
      %v425 = vrot.slane %v420, %v424
      %v426 = vlaneseq
      %v427 = vshrl.u32 %v426, 7
      %v428 = vsub.s32 1, %v427
      %v429 = vrot.slane %v420, %v428
      %v432 = vmul.f32 %v418, %v425
      %v433 = vmul.f32 %v417, %v429
      %s434 = scalar_lea.vmem %s2, 8
      %v435 = vld [vmem:[%s434] sm:$0xf]
      %v437 = vsel %vm250, %v435, 0
      %v440 = vsel %vm254, %v432, 0
      %v443 = vsel %vm254, %v433, 0
      %445 = vmatprep.subr.mxu0 %v443
      %446 = vmatpush1.msra.mxu0 %v440
      %447 = vmatprep.subr.mxu0 0.0
      %448 = vmatpush1.msra.mxu0 0.0
      %449 = vmatprep.subr.mxu0 0.0
      %450 = vmatpush1.msra.mxu0 0.0
      %451 = vmatprep.subr.mxu0 0.0
      %452 = vmatpush1.msra.mxu0 0.0
      %453 = vmatprep.subr.mxu0 0.0
      %454 = vmatpush1.msra.mxu0 0.0
      %455 = vmatprep.subr.mxu0 0.0
      %456 = vmatpush1.msra.mxu0 0.0
      %457 = vmatprep.subr.mxu0 0.0
      %458 = vmatpush1.msra.mxu0 0.0
      %459 = vmatprep.subr.mxu0 0.0
      %460 = vmatpush1.msra.mxu0 0.0
      %461 = vmatprep.subr.mxu0 0.0
      %462 = vmatpush1.msra.mxu0 0.0
      %463 = vmatprep.subr.mxu0 0.0
      %464 = vmatpush1.msra.mxu0 0.0
      %465 = vmatprep.subr.mxu0 0.0
      %466 = vmatpush1.msra.mxu0 0.0
      %467 = vmatprep.subr.mxu0 0.0
      %468 = vmatpush1.msra.mxu0 0.0
      %469 = vmatprep.subr.mxu0 0.0
      %470 = vmatpush1.msra.mxu0 0.0
      %471 = vmatprep.subr.mxu0 0.0
      %472 = vmatpush1.msra.mxu0 0.0
      %473 = vmatprep.subr.mxu0 0.0
      %474 = vmatpush1.msra.mxu0 0.0
      %475 = vmatprep.subr.mxu0 0.0
      %476 = vmatpush1.msra.mxu0 0.0
      %477 = vmatprep.subr.mxu0 0.0
      %478 = vmatpush1.msra.mxu0 0.0
      %479 = vmatprep.subr.mxu0 0.0
      %480 = vmatpush1.msra.mxu0 0.0
      %481 = vmatprep.subr.mxu0 0.0
      %482 = vmatpush1.msra.mxu0 0.0
      %483 = vmatprep.subr.mxu0 0.0
      %484 = vmatpush1.msra.mxu0 0.0
      %485 = vmatprep.subr.mxu0 0.0
      %486 = vmatpush1.msra.mxu0 0.0
      %487 = vmatprep.subr.mxu0 0.0
      %488 = vmatpush1.msra.mxu0 0.0
      %489 = vmatprep.subr.mxu0 0.0
      %490 = vmatpush1.msra.mxu0 0.0
      %491 = vmatprep.subr.mxu0 0.0
      %492 = vmatpush1.msra.mxu0 0.0
      %493 = vmatprep.subr.mxu0 0.0
      %494 = vmatpush1.msra.mxu0 0.0
      %495 = vmatprep.subr.mxu0 0.0
      %496 = vmatpush1.msra.mxu0 0.0
      %497 = vmatprep.subr.mxu0 0.0
      %498 = vmatpush1.msra.mxu0 0.0
      %499 = vmatprep.subr.mxu0 0.0
      %500 = vmatpush1.msra.mxu0 0.0
      %501 = vmatprep.subr.mxu0 0.0
      %502 = vmatpush1.msra.mxu0 0.0
      %503 = vmatprep.subr.mxu0 0.0
      %504 = vmatpush1.msra.mxu0 0.0
      %505 = vmatprep.subr.mxu0 0.0
      %506 = vmatpush1.msra.mxu0 0.0
      %507 = vmatprep.subr.mxu0 0.0
      %508 = vmatpush1.msra.mxu0 0.0
      %509 = vmatprep.mubr.f32.mxu0 0.0
      %510 = vmatmul.mubr.f32.gmra.mrb[0].mxu0 %v437
      %v511 = vpop.f32.mrb[0].mxu0
      %v512 = vadd.f32 0.0, %v511
      %v513 = vpop.f32.mrb[0].mxu0
      %v514 = vadd.f32 0.0, %v513
      %515 = vdwg.mxu0
      %v516 = vadd.f32 %v408, %v512
      %v517 = vadd.f32 %v410, %v514
      %518 = vrot.lane.b32.xlu0 %v198, 1
      %v519 = vpop.permute.xlu0 %518
      %520 = vrot.lane.b32.xlu0 %v200, 1
      %v521 = vpop.permute.xlu0 %520
      %vm522 = vcmp.lt.s32.totalorder %v207, 1
      %v523 = vsel %vm522, %v519, %v521
      %v524 = vsel %vm522, %v521, %v519
      %s525 = scalar_lea.vmem %s1, 6
      %v526 = vld [vmem:[%s525] sm:$0x3]
      %v528 = vlaneseq
      %v529 = vshrl.u32 %v528, 7
      %v530 = vsub.s32 0, %v529
      %v531 = vrot.slane %v526, %v530
      %v532 = vlaneseq
      %v533 = vshrl.u32 %v532, 7
      %v534 = vsub.s32 1, %v533
      %v535 = vrot.slane %v526, %v534
      %v538 = vmul.f32 %v524, %v531
      %v539 = vmul.f32 %v523, %v535
      %s540 = scalar_lea.vmem %s2, 12
      %v541 = vld [vmem:[%s540] sm:$0xf]
      %v543 = vsel %vm250, %v541, 0
      %v546 = vsel %vm254, %v538, 0
      %v549 = vsel %vm254, %v539, 0
      %551 = vmatprep.subr.mxu0 %v549
      %552 = vmatpush1.msra.mxu0 %v546
      %553 = vmatprep.subr.mxu0 0.0
      %554 = vmatpush1.msra.mxu0 0.0
      %555 = vmatprep.subr.mxu0 0.0
      %556 = vmatpush1.msra.mxu0 0.0
      %557 = vmatprep.subr.mxu0 0.0
      %558 = vmatpush1.msra.mxu0 0.0
      %559 = vmatprep.subr.mxu0 0.0
      %560 = vmatpush1.msra.mxu0 0.0
      %561 = vmatprep.subr.mxu0 0.0
      %562 = vmatpush1.msra.mxu0 0.0
      %563 = vmatprep.subr.mxu0 0.0
      %564 = vmatpush1.msra.mxu0 0.0
      %565 = vmatprep.subr.mxu0 0.0
      %566 = vmatpush1.msra.mxu0 0.0
      %567 = vmatprep.subr.mxu0 0.0
      %568 = vmatpush1.msra.mxu0 0.0
      %569 = vmatprep.subr.mxu0 0.0
      %570 = vmatpush1.msra.mxu0 0.0
      %571 = vmatprep.subr.mxu0 0.0
      %572 = vmatpush1.msra.mxu0 0.0
      %573 = vmatprep.subr.mxu0 0.0
      %574 = vmatpush1.msra.mxu0 0.0
      %575 = vmatprep.subr.mxu0 0.0
      %576 = vmatpush1.msra.mxu0 0.0
      %577 = vmatprep.subr.mxu0 0.0
      %578 = vmatpush1.msra.mxu0 0.0
      %579 = vmatprep.subr.mxu0 0.0
      %580 = vmatpush1.msra.mxu0 0.0
      %581 = vmatprep.subr.mxu0 0.0
      %582 = vmatpush1.msra.mxu0 0.0
      %583 = vmatprep.subr.mxu0 0.0
      %584 = vmatpush1.msra.mxu0 0.0
      %585 = vmatprep.subr.mxu0 0.0
      %586 = vmatpush1.msra.mxu0 0.0
      %587 = vmatprep.subr.mxu0 0.0
      %588 = vmatpush1.msra.mxu0 0.0
      %589 = vmatprep.subr.mxu0 0.0
      %590 = vmatpush1.msra.mxu0 0.0
      %591 = vmatprep.subr.mxu0 0.0
      %592 = vmatpush1.msra.mxu0 0.0
      %593 = vmatprep.subr.mxu0 0.0
      %594 = vmatpush1.msra.mxu0 0.0
      %595 = vmatprep.subr.mxu0 0.0
      %596 = vmatpush1.msra.mxu0 0.0
      %597 = vmatprep.subr.mxu0 0.0
      %598 = vmatpush1.msra.mxu0 0.0
      %599 = vmatprep.subr.mxu0 0.0
      %600 = vmatpush1.msra.mxu0 0.0
      %601 = vmatprep.subr.mxu0 0.0
      %602 = vmatpush1.msra.mxu0 0.0
      %603 = vmatprep.subr.mxu0 0.0
      %604 = vmatpush1.msra.mxu0 0.0
      %605 = vmatprep.subr.mxu0 0.0
      %606 = vmatpush1.msra.mxu0 0.0
      %607 = vmatprep.subr.mxu0 0.0
      %608 = vmatpush1.msra.mxu0 0.0
      %609 = vmatprep.subr.mxu0 0.0
      %610 = vmatpush1.msra.mxu0 0.0
      %611 = vmatprep.subr.mxu0 0.0
      %612 = vmatpush1.msra.mxu0 0.0
      %613 = vmatprep.subr.mxu0 0.0
      %614 = vmatpush1.msra.mxu0 0.0
      %615 = vmatprep.mubr.f32.mxu0 0.0
      %616 = vmatmul.mubr.f32.gmra.mrb[0].mxu0 %v543
      %v617 = vpop.f32.mrb[0].mxu0
      %v618 = vadd.f32 0.0, %v617
      %v619 = vpop.f32.mrb[0].mxu0
      %v620 = vadd.f32 0.0, %v619
      %621 = vdwg.mxu0
      %v622 = vadd.f32 %v516, %v618
      %v623 = vadd.f32 %v517, %v620
      %s624 = scalar_lea.vmem %s2, 16
      %v625 = vld [vmem:[%s624] sm:$0xf]
      %v627 = vsel %vm250, %v625, 0
      %v629 = vsel %vm254, %v198, 0
      %v631 = vsel %vm254, %v200, 0
      %633 = vmatprep.subr.mxu0 %v631
      %634 = vmatpush1.msra.mxu0 %v629
      %635 = vmatprep.subr.mxu0 0.0
      %636 = vmatpush1.msra.mxu0 0.0
      %637 = vmatprep.subr.mxu0 0.0
      %638 = vmatpush1.msra.mxu0 0.0
      %639 = vmatprep.subr.mxu0 0.0
      %640 = vmatpush1.msra.mxu0 0.0
      %641 = vmatprep.subr.mxu0 0.0
      %642 = vmatpush1.msra.mxu0 0.0
      %643 = vmatprep.subr.mxu0 0.0
      %644 = vmatpush1.msra.mxu0 0.0
      %645 = vmatprep.subr.mxu0 0.0
      %646 = vmatpush1.msra.mxu0 0.0
      %647 = vmatprep.subr.mxu0 0.0
      %648 = vmatpush1.msra.mxu0 0.0
      %649 = vmatprep.subr.mxu0 0.0
      %650 = vmatpush1.msra.mxu0 0.0
      %651 = vmatprep.subr.mxu0 0.0
      %652 = vmatpush1.msra.mxu0 0.0
      %653 = vmatprep.subr.mxu0 0.0
      %654 = vmatpush1.msra.mxu0 0.0
      %655 = vmatprep.subr.mxu0 0.0
      %656 = vmatpush1.msra.mxu0 0.0
      %657 = vmatprep.subr.mxu0 0.0
      %658 = vmatpush1.msra.mxu0 0.0
      %659 = vmatprep.subr.mxu0 0.0
      %660 = vmatpush1.msra.mxu0 0.0
      %661 = vmatprep.subr.mxu0 0.0
      %662 = vmatpush1.msra.mxu0 0.0
      %663 = vmatprep.subr.mxu0 0.0
      %664 = vmatpush1.msra.mxu0 0.0
      %665 = vmatprep.subr.mxu0 0.0
      %666 = vmatpush1.msra.mxu0 0.0
      %667 = vmatprep.subr.mxu0 0.0
      %668 = vmatpush1.msra.mxu0 0.0
      %669 = vmatprep.subr.mxu0 0.0
      %670 = vmatpush1.msra.mxu0 0.0
      %671 = vmatprep.subr.mxu0 0.0
      %672 = vmatpush1.msra.mxu0 0.0
      %673 = vmatprep.subr.mxu0 0.0
      %674 = vmatpush1.msra.mxu0 0.0
      %675 = vmatprep.subr.mxu0 0.0
      %676 = vmatpush1.msra.mxu0 0.0
      %677 = vmatprep.subr.mxu0 0.0
      %678 = vmatpush1.msra.mxu0 0.0
      %679 = vmatprep.subr.mxu0 0.0
      %680 = vmatpush1.msra.mxu0 0.0
      %681 = vmatprep.subr.mxu0 0.0
      %682 = vmatpush1.msra.mxu0 0.0
      %683 = vmatprep.subr.mxu0 0.0
      %684 = vmatpush1.msra.mxu0 0.0
      %685 = vmatprep.subr.mxu0 0.0
      %686 = vmatpush1.msra.mxu0 0.0
      %687 = vmatprep.subr.mxu0 0.0
      %688 = vmatpush1.msra.mxu0 0.0
      %689 = vmatprep.subr.mxu0 0.0
      %690 = vmatpush1.msra.mxu0 0.0
      %691 = vmatprep.subr.mxu0 0.0
      %692 = vmatpush1.msra.mxu0 0.0
      %693 = vmatprep.subr.mxu0 0.0
      %694 = vmatpush1.msra.mxu0 0.0
      %695 = vmatprep.subr.mxu0 0.0
      %696 = vmatpush1.msra.mxu0 0.0
      %697 = vmatprep.mubr.f32.mxu0 0.0
      %698 = vmatmul.mubr.f32.gmra.mrb[0].mxu0 %v627
      %v699 = vpop.f32.mrb[0].mxu0
      %v700 = vadd.f32 0.0, %v699
      %v701 = vpop.f32.mrb[0].mxu0
      %v702 = vadd.f32 0.0, %v701
      %703 = vdwg.mxu0
      %v704 = vadd.f32 %v622, %v700
      %v705 = vadd.f32 %v623, %v702
      %706 = vrot.lane.b32.xlu0 %v198, 127
      %v707 = vpop.permute.xlu0 %706
      %708 = vrot.lane.b32.xlu0 %v200, 127
      %v709 = vpop.permute.xlu0 %708
      %vm710 = vcmp.lt.s32.totalorder %v207, 127
      %v711 = vsel %vm710, %v707, %v709
      %v712 = vsel %vm710, %v709, %v707
      %s713 = scalar_lea.vmem %s1, 8
      %v714 = vld [vmem:[%s713] sm:$0x3]
      %v716 = vlaneseq
      %v717 = vshrl.u32 %v716, 7
      %v718 = vsub.s32 0, %v717
      %v719 = vrot.slane %v714, %v718
      %v720 = vlaneseq
      %v721 = vshrl.u32 %v720, 7
      %v722 = vsub.s32 1, %v721
      %v723 = vrot.slane %v714, %v722
      %v726 = vmul.f32 %v711, %v719
      %v727 = vmul.f32 %v712, %v723
      %s728 = scalar_lea.vmem %s2, 20
      %v729 = vld [vmem:[%s728] sm:$0xf]
      %v731 = vsel %vm250, %v729, 0
      %v734 = vsel %vm254, %v726, 0
      %v737 = vsel %vm254, %v727, 0
      %739 = vmatprep.subr.mxu0 %v737
      %740 = vmatpush1.msra.mxu0 %v734
      %741 = vmatprep.subr.mxu0 0.0
      %742 = vmatpush1.msra.mxu0 0.0
      %743 = vmatprep.subr.mxu0 0.0
      %744 = vmatpush1.msra.mxu0 0.0
      %745 = vmatprep.subr.mxu0 0.0
      %746 = vmatpush1.msra.mxu0 0.0
      %747 = vmatprep.subr.mxu0 0.0
      %748 = vmatpush1.msra.mxu0 0.0
      %749 = vmatprep.subr.mxu0 0.0
      %750 = vmatpush1.msra.mxu0 0.0
      %751 = vmatprep.subr.mxu0 0.0
      %752 = vmatpush1.msra.mxu0 0.0
      %753 = vmatprep.subr.mxu0 0.0
      %754 = vmatpush1.msra.mxu0 0.0
      %755 = vmatprep.subr.mxu0 0.0
      %756 = vmatpush1.msra.mxu0 0.0
      %757 = vmatprep.subr.mxu0 0.0
      %758 = vmatpush1.msra.mxu0 0.0
      %759 = vmatprep.subr.mxu0 0.0
      %760 = vmatpush1.msra.mxu0 0.0
      %761 = vmatprep.subr.mxu0 0.0
      %762 = vmatpush1.msra.mxu0 0.0
      %763 = vmatprep.subr.mxu0 0.0
      %764 = vmatpush1.msra.mxu0 0.0
      %765 = vmatprep.subr.mxu0 0.0
      %766 = vmatpush1.msra.mxu0 0.0
      %767 = vmatprep.subr.mxu0 0.0
      %768 = vmatpush1.msra.mxu0 0.0
      %769 = vmatprep.subr.mxu0 0.0
      %770 = vmatpush1.msra.mxu0 0.0
      %771 = vmatprep.subr.mxu0 0.0
      %772 = vmatpush1.msra.mxu0 0.0
      %773 = vmatprep.subr.mxu0 0.0
      %774 = vmatpush1.msra.mxu0 0.0
      %775 = vmatprep.subr.mxu0 0.0
      %776 = vmatpush1.msra.mxu0 0.0
      %777 = vmatprep.subr.mxu0 0.0
      %778 = vmatpush1.msra.mxu0 0.0
      %779 = vmatprep.subr.mxu0 0.0
      %780 = vmatpush1.msra.mxu0 0.0
      %781 = vmatprep.subr.mxu0 0.0
      %782 = vmatpush1.msra.mxu0 0.0
      %783 = vmatprep.subr.mxu0 0.0
      %784 = vmatpush1.msra.mxu0 0.0
      %785 = vmatprep.subr.mxu0 0.0
      %786 = vmatpush1.msra.mxu0 0.0
      %787 = vmatprep.subr.mxu0 0.0
      %788 = vmatpush1.msra.mxu0 0.0
      %789 = vmatprep.subr.mxu0 0.0
      %790 = vmatpush1.msra.mxu0 0.0
      %791 = vmatprep.subr.mxu0 0.0
      %792 = vmatpush1.msra.mxu0 0.0
      %793 = vmatprep.subr.mxu0 0.0
      %794 = vmatpush1.msra.mxu0 0.0
      %795 = vmatprep.subr.mxu0 0.0
      %796 = vmatpush1.msra.mxu0 0.0
      %797 = vmatprep.subr.mxu0 0.0
      %798 = vmatpush1.msra.mxu0 0.0
      %799 = vmatprep.subr.mxu0 0.0
      %800 = vmatpush1.msra.mxu0 0.0
      %801 = vmatprep.subr.mxu0 0.0
      %802 = vmatpush1.msra.mxu0 0.0
      %803 = vmatprep.mubr.f32.mxu0 0.0
      %804 = vmatmul.mubr.f32.gmra.mrb[0].mxu0 %v731
      %v805 = vpop.f32.mrb[0].mxu0
      %v806 = vadd.f32 0.0, %v805
      %v807 = vpop.f32.mrb[0].mxu0
      %v808 = vadd.f32 0.0, %v807
      %809 = vdwg.mxu0
      %v810 = vadd.f32 %v704, %v806
      %v811 = vadd.f32 %v705, %v808
      %812 = vrot.lane.b32.xlu0 %v198, 113
      %v813 = vpop.permute.xlu0 %812
      %814 = vrot.lane.b32.xlu0 %v200, 113
      %v815 = vpop.permute.xlu0 %814
      %vm816 = vcmp.lt.s32.totalorder %v207, 113
      %v817 = vsel %vm816, %v813, %v815
      %v818 = vsel %vm816, %v815, %v813
      %s819 = scalar_lea.vmem %s1, 10
      %v820 = vld [vmem:[%s819] sm:$0x3]
      %v822 = vlaneseq
      %v823 = vshrl.u32 %v822, 7
      %v824 = vsub.s32 0, %v823
      %v825 = vrot.slane %v820, %v824
      %v826 = vlaneseq
      %v827 = vshrl.u32 %v826, 7
      %v828 = vsub.s32 1, %v827
      %v829 = vrot.slane %v820, %v828
      %v832 = vmul.f32 %v817, %v825
      %v833 = vmul.f32 %v818, %v829
      %s834 = scalar_lea.vmem %s2, 24
      %v835 = vld [vmem:[%s834] sm:$0xf]
      %v837 = vsel %vm250, %v835, 0
      %v840 = vsel %vm254, %v832, 0
      %v843 = vsel %vm254, %v833, 0
      %845 = vmatprep.subr.mxu0 %v843
      %846 = vmatpush1.msra.mxu0 %v840
      %847 = vmatprep.subr.mxu0 0.0
      %848 = vmatpush1.msra.mxu0 0.0
      %849 = vmatprep.subr.mxu0 0.0
      %850 = vmatpush1.msra.mxu0 0.0
      %851 = vmatprep.subr.mxu0 0.0
      %852 = vmatpush1.msra.mxu0 0.0
      %853 = vmatprep.subr.mxu0 0.0
      %854 = vmatpush1.msra.mxu0 0.0
      %855 = vmatprep.subr.mxu0 0.0
      %856 = vmatpush1.msra.mxu0 0.0
      %857 = vmatprep.subr.mxu0 0.0
      %858 = vmatpush1.msra.mxu0 0.0
      %859 = vmatprep.subr.mxu0 0.0
      %860 = vmatpush1.msra.mxu0 0.0
      %861 = vmatprep.subr.mxu0 0.0
      %862 = vmatpush1.msra.mxu0 0.0
      %863 = vmatprep.subr.mxu0 0.0
      %864 = vmatpush1.msra.mxu0 0.0
      %865 = vmatprep.subr.mxu0 0.0
      %866 = vmatpush1.msra.mxu0 0.0
      %867 = vmatprep.subr.mxu0 0.0
      %868 = vmatpush1.msra.mxu0 0.0
      %869 = vmatprep.subr.mxu0 0.0
      %870 = vmatpush1.msra.mxu0 0.0
      %871 = vmatprep.subr.mxu0 0.0
      %872 = vmatpush1.msra.mxu0 0.0
      %873 = vmatprep.subr.mxu0 0.0
      %874 = vmatpush1.msra.mxu0 0.0
      %875 = vmatprep.subr.mxu0 0.0
      %876 = vmatpush1.msra.mxu0 0.0
      %877 = vmatprep.subr.mxu0 0.0
      %878 = vmatpush1.msra.mxu0 0.0
      %879 = vmatprep.subr.mxu0 0.0
      %880 = vmatpush1.msra.mxu0 0.0
      %881 = vmatprep.subr.mxu0 0.0
      %882 = vmatpush1.msra.mxu0 0.0
      %883 = vmatprep.subr.mxu0 0.0
      %884 = vmatpush1.msra.mxu0 0.0
      %885 = vmatprep.subr.mxu0 0.0
      %886 = vmatpush1.msra.mxu0 0.0
      %887 = vmatprep.subr.mxu0 0.0
      %888 = vmatpush1.msra.mxu0 0.0
      %889 = vmatprep.subr.mxu0 0.0
      %890 = vmatpush1.msra.mxu0 0.0
      %891 = vmatprep.subr.mxu0 0.0
      %892 = vmatpush1.msra.mxu0 0.0
      %893 = vmatprep.subr.mxu0 0.0
      %894 = vmatpush1.msra.mxu0 0.0
      %895 = vmatprep.subr.mxu0 0.0
      %896 = vmatpush1.msra.mxu0 0.0
      %897 = vmatprep.subr.mxu0 0.0
      %898 = vmatpush1.msra.mxu0 0.0
      %899 = vmatprep.subr.mxu0 0.0
      %900 = vmatpush1.msra.mxu0 0.0
      %901 = vmatprep.subr.mxu0 0.0
      %902 = vmatpush1.msra.mxu0 0.0
      %903 = vmatprep.subr.mxu0 0.0
      %904 = vmatpush1.msra.mxu0 0.0
      %905 = vmatprep.subr.mxu0 0.0
      %906 = vmatpush1.msra.mxu0 0.0
      %907 = vmatprep.subr.mxu0 0.0
      %908 = vmatpush1.msra.mxu0 0.0
      %909 = vmatprep.mubr.f32.mxu0 0.0
      %910 = vmatmul.mubr.f32.gmra.mrb[0].mxu0 %v837
      %v911 = vpop.f32.mrb[0].mxu0
      %v912 = vadd.f32 0.0, %v911
      %v913 = vpop.f32.mrb[0].mxu0
      %v914 = vadd.f32 0.0, %v913
      %915 = vdwg.mxu0
      %v916 = vadd.f32 %v810, %v912
      %v917 = vadd.f32 %v811, %v914
      %918 = vrot.lane.b32.xlu0 %v198, 112
      %v919 = vpop.permute.xlu0 %918
      %920 = vrot.lane.b32.xlu0 %v200, 112
      %v921 = vpop.permute.xlu0 %920
      %vm922 = vcmp.lt.s32.totalorder %v207, 112
      %v923 = vsel %vm922, %v919, %v921
      %v924 = vsel %vm922, %v921, %v919
      %s925 = scalar_lea.vmem %s1, 12
      %v926 = vld [vmem:[%s925] sm:$0x3]
      %v928 = vlaneseq
      %v929 = vshrl.u32 %v928, 7
      %v930 = vsub.s32 0, %v929
      %v931 = vrot.slane %v926, %v930
      %v932 = vlaneseq
      %v933 = vshrl.u32 %v932, 7
      %v934 = vsub.s32 1, %v933
      %v935 = vrot.slane %v926, %v934
      %v938 = vmul.f32 %v923, %v931
      %v939 = vmul.f32 %v924, %v935
      %s940 = scalar_lea.vmem %s2, 28
      %v941 = vld [vmem:[%s940] sm:$0xf]
      %v943 = vsel %vm250, %v941, 0
      %v946 = vsel %vm254, %v938, 0
      %v949 = vsel %vm254, %v939, 0
      %951 = vmatprep.subr.mxu0 %v949
      %952 = vmatpush1.msra.mxu0 %v946
      %953 = vmatprep.subr.mxu0 0.0
      %954 = vmatpush1.msra.mxu0 0.0
      %955 = vmatprep.subr.mxu0 0.0
      %956 = vmatpush1.msra.mxu0 0.0
      %957 = vmatprep.subr.mxu0 0.0
      %958 = vmatpush1.msra.mxu0 0.0
      %959 = vmatprep.subr.mxu0 0.0
      %960 = vmatpush1.msra.mxu0 0.0
      %961 = vmatprep.subr.mxu0 0.0
      %962 = vmatpush1.msra.mxu0 0.0
      %963 = vmatprep.subr.mxu0 0.0
      %964 = vmatpush1.msra.mxu0 0.0
      %965 = vmatprep.subr.mxu0 0.0
      %966 = vmatpush1.msra.mxu0 0.0
      %967 = vmatprep.subr.mxu0 0.0
      %968 = vmatpush1.msra.mxu0 0.0
      %969 = vmatprep.subr.mxu0 0.0
      %970 = vmatpush1.msra.mxu0 0.0
      %971 = vmatprep.subr.mxu0 0.0
      %972 = vmatpush1.msra.mxu0 0.0
      %973 = vmatprep.subr.mxu0 0.0
      %974 = vmatpush1.msra.mxu0 0.0
      %975 = vmatprep.subr.mxu0 0.0
      %976 = vmatpush1.msra.mxu0 0.0
      %977 = vmatprep.subr.mxu0 0.0
      %978 = vmatpush1.msra.mxu0 0.0
      %979 = vmatprep.subr.mxu0 0.0
      %980 = vmatpush1.msra.mxu0 0.0
      %981 = vmatprep.subr.mxu0 0.0
      %982 = vmatpush1.msra.mxu0 0.0
      %983 = vmatprep.subr.mxu0 0.0
      %984 = vmatpush1.msra.mxu0 0.0
      %985 = vmatprep.subr.mxu0 0.0
      %986 = vmatpush1.msra.mxu0 0.0
      %987 = vmatprep.subr.mxu0 0.0
      %988 = vmatpush1.msra.mxu0 0.0
      %989 = vmatprep.subr.mxu0 0.0
      %990 = vmatpush1.msra.mxu0 0.0
      %991 = vmatprep.subr.mxu0 0.0
      %992 = vmatpush1.msra.mxu0 0.0
      %993 = vmatprep.subr.mxu0 0.0
      %994 = vmatpush1.msra.mxu0 0.0
      %995 = vmatprep.subr.mxu0 0.0
      %996 = vmatpush1.msra.mxu0 0.0
      %997 = vmatprep.subr.mxu0 0.0
      %998 = vmatpush1.msra.mxu0 0.0
      %999 = vmatprep.subr.mxu0 0.0
      %1000 = vmatpush1.msra.mxu0 0.0
      %1001 = vmatprep.subr.mxu0 0.0
      %1002 = vmatpush1.msra.mxu0 0.0
      %1003 = vmatprep.subr.mxu0 0.0
      %1004 = vmatpush1.msra.mxu0 0.0
      %1005 = vmatprep.subr.mxu0 0.0
      %1006 = vmatpush1.msra.mxu0 0.0
      %1007 = vmatprep.subr.mxu0 0.0
      %1008 = vmatpush1.msra.mxu0 0.0
      %1009 = vmatprep.subr.mxu0 0.0
      %1010 = vmatpush1.msra.mxu0 0.0
      %1011 = vmatprep.subr.mxu0 0.0
      %1012 = vmatpush1.msra.mxu0 0.0
      %1013 = vmatprep.subr.mxu0 0.0
      %1014 = vmatpush1.msra.mxu0 0.0
      %1015 = vmatprep.mubr.f32.mxu0 0.0
      %1016 = vmatmul.mubr.f32.gmra.mrb[0].mxu0 %v943
      %v1017 = vpop.f32.mrb[0].mxu0
      %v1018 = vadd.f32 0.0, %v1017
      %v1019 = vpop.f32.mrb[0].mxu0
      %v1020 = vadd.f32 0.0, %v1019
      %1021 = vdwg.mxu0
      %v1022 = vadd.f32 %v916, %v1018
      %v1023 = vadd.f32 %v917, %v1020
      %1024 = vrot.lane.b32.xlu0 %v198, 111
      %v1025 = vpop.permute.xlu0 %1024
      %1026 = vrot.lane.b32.xlu0 %v200, 111
      %v1027 = vpop.permute.xlu0 %1026
      %vm1028 = vcmp.lt.s32.totalorder %v207, 111
      %v1029 = vsel %vm1028, %v1025, %v1027
      %v1030 = vsel %vm1028, %v1027, %v1025
      %s1031 = scalar_lea.vmem %s1, 14
      %v1032 = vld [vmem:[%s1031] sm:$0x3]
      %v1034 = vlaneseq
      %v1035 = vshrl.u32 %v1034, 7
      %v1036 = vsub.s32 0, %v1035
      %v1037 = vrot.slane %v1032, %v1036
      %v1038 = vlaneseq
      %v1039 = vshrl.u32 %v1038, 7
      %v1040 = vsub.s32 1, %v1039
      %v1041 = vrot.slane %v1032, %v1040
      %v1044 = vmul.f32 %v1029, %v1037
      %v1045 = vmul.f32 %v1030, %v1041
      %s1046 = scalar_lea.vmem %s2, 32
      %v1047 = vld [vmem:[%s1046] sm:$0xf]
      %v1049 = vsel %vm250, %v1047, 0
      %v1052 = vsel %vm254, %v1044, 0
      %v1055 = vsel %vm254, %v1045, 0
      %1057 = vmatprep.subr.mxu0 %v1055
      %1058 = vmatpush1.msra.mxu0 %v1052
      %1059 = vmatprep.subr.mxu0 0.0
      %1060 = vmatpush1.msra.mxu0 0.0
      %1061 = vmatprep.subr.mxu0 0.0
      %1062 = vmatpush1.msra.mxu0 0.0
      %1063 = vmatprep.subr.mxu0 0.0
      %1064 = vmatpush1.msra.mxu0 0.0
      %1065 = vmatprep.subr.mxu0 0.0
      %1066 = vmatpush1.msra.mxu0 0.0
      %1067 = vmatprep.subr.mxu0 0.0
      %1068 = vmatpush1.msra.mxu0 0.0
      %1069 = vmatprep.subr.mxu0 0.0
      %1070 = vmatpush1.msra.mxu0 0.0
      %1071 = vmatprep.subr.mxu0 0.0
      %1072 = vmatpush1.msra.mxu0 0.0
      %1073 = vmatprep.subr.mxu0 0.0
      %1074 = vmatpush1.msra.mxu0 0.0
      %1075 = vmatprep.subr.mxu0 0.0
      %1076 = vmatpush1.msra.mxu0 0.0
      %1077 = vmatprep.subr.mxu0 0.0
      %1078 = vmatpush1.msra.mxu0 0.0
      %1079 = vmatprep.subr.mxu0 0.0
      %1080 = vmatpush1.msra.mxu0 0.0
      %1081 = vmatprep.subr.mxu0 0.0
      %1082 = vmatpush1.msra.mxu0 0.0
      %1083 = vmatprep.subr.mxu0 0.0
      %1084 = vmatpush1.msra.mxu0 0.0
      %1085 = vmatprep.subr.mxu0 0.0
      %1086 = vmatpush1.msra.mxu0 0.0
      %1087 = vmatprep.subr.mxu0 0.0
      %1088 = vmatpush1.msra.mxu0 0.0
      %1089 = vmatprep.subr.mxu0 0.0
      %1090 = vmatpush1.msra.mxu0 0.0
      %1091 = vmatprep.subr.mxu0 0.0
      %1092 = vmatpush1.msra.mxu0 0.0
      %1093 = vmatprep.subr.mxu0 0.0
      %1094 = vmatpush1.msra.mxu0 0.0
      %1095 = vmatprep.subr.mxu0 0.0
      %1096 = vmatpush1.msra.mxu0 0.0
      %1097 = vmatprep.subr.mxu0 0.0
      %1098 = vmatpush1.msra.mxu0 0.0
      %1099 = vmatprep.subr.mxu0 0.0
      %1100 = vmatpush1.msra.mxu0 0.0
      %1101 = vmatprep.subr.mxu0 0.0
      %1102 = vmatpush1.msra.mxu0 0.0
      %1103 = vmatprep.subr.mxu0 0.0
      %1104 = vmatpush1.msra.mxu0 0.0
      %1105 = vmatprep.subr.mxu0 0.0
      %1106 = vmatpush1.msra.mxu0 0.0
      %1107 = vmatprep.subr.mxu0 0.0
      %1108 = vmatpush1.msra.mxu0 0.0
      %1109 = vmatprep.subr.mxu0 0.0
      %1110 = vmatpush1.msra.mxu0 0.0
      %1111 = vmatprep.subr.mxu0 0.0
      %1112 = vmatpush1.msra.mxu0 0.0
      %1113 = vmatprep.subr.mxu0 0.0
      %1114 = vmatpush1.msra.mxu0 0.0
      %1115 = vmatprep.subr.mxu0 0.0
      %1116 = vmatpush1.msra.mxu0 0.0
      %1117 = vmatprep.subr.mxu0 0.0
      %1118 = vmatpush1.msra.mxu0 0.0
      %1119 = vmatprep.subr.mxu0 0.0
      %1120 = vmatpush1.msra.mxu0 0.0
      %1121 = vmatprep.mubr.f32.mxu0 0.0
      %1122 = vmatmul.mubr.f32.gmra.mrb[0].mxu0 %v1049
      %v1123 = vpop.f32.mrb[0].mxu0
      %v1124 = vadd.f32 0.0, %v1123
      %v1125 = vpop.f32.mrb[0].mxu0
      %v1126 = vadd.f32 0.0, %v1125
      %1127 = vdwg.mxu0
      %v1128 = vadd.f32 %v1022, %v1124
      %v1129 = vadd.f32 %v1023, %v1126
      %v1130 = vsel %vm254, %v1128, 0.0
      %v1131 = vsel %vm254, %v1129, 0.0
      %v1132 = vadd.f32 %v1130, %v1131
      %1133 = vadd.xlane.f32.xlu0 %v1132
      %v1134 = vpop.xlane.xlu0 %1133
      %v1135 = vrcp.pop 256.0
      %v1136 = vmul.f32 %v1134, %v1135
      %v1137 = vmul.f32 %v1128, %v1128
      %v1138 = vmul.f32 %v1129, %v1129
      %v1139 = vsel %vm254, %v1137, 0.0
      %v1140 = vsel %vm254, %v1138, 0.0
      %v1141 = vadd.f32 %v1139, %v1140
      %1142 = vadd.xlane.f32.xlu0 %v1141
      %v1143 = vpop.xlane.xlu0 %1142
      %v1144 = vmul.f32 %v1143, %v1135
      %v1145 = vmul.f32 %v1136, %v1136
      %v1146 = vsub.f32 %v1144, %v1145
      %v1147 = vsub.f32 %v1128, %v1136
      %v1148 = vsub.f32 %v1129, %v1136
      %v1149 = vadd.f32 %v1146, 1e-05
      %v1150 = vrsqrt.pop %v1149
      %v1151 = vmul.f32 %v1147, %v1150
      %v1152 = vmul.f32 %v1148, %v1150
      %v1153 = vmax.f32 %v1151, 0.0
      %v1154 = vmax.f32 %v1152, 0.0
      %1155 = vrot.lane.b32.xlu0 %v1153, 17
      %v1156 = vpop.permute.xlu0 %1155
      %1157 = vrot.lane.b32.xlu0 %v1154, 17
      %v1158 = vpop.permute.xlu0 %1157
      %v1159 = vsel %vm208, %v1156, %v1158
      %v1160 = vsel %vm208, %v1158, %v1156
      %v1161 = vmul.f32 %v1160, %v216
      %v1162 = vmul.f32 %v1159, %v220
      %v1163 = vld [vmem:[%s3] sm:$0xf]
      %1164 = vrot.lane.b32.xlu0 %v1153, 16
      %v1165 = vpop.permute.xlu0 %1164
      %1166 = vrot.lane.b32.xlu0 %v1154, 16
      %v1167 = vpop.permute.xlu0 %1166
      %v1168 = vsel %vm230, %v1165, %v1167
      %v1169 = vsel %vm230, %v1167, %v1165
      %v1170 = vmul.f32 %v1169, %v239
      %v1171 = vmul.f32 %v1168, %v243
      %s1172 = scalar_lea.vmem %s3, 4
      %v1173 = vld [vmem:[%s1172] sm:$0xf]
      %v1175 = vsel %vm250, %v1173, 0
      %v1178 = vsel %vm254, %v1170, 0
      %v1181 = vsel %vm254, %v1171, 0
      %1183 = vmatprep.subr.mxu0 %v1181
      %1184 = vmatpush1.msra.mxu0 %v1178
      %1185 = vmatprep.subr.mxu0 0.0
      %1186 = vmatpush1.msra.mxu0 0.0
      %1187 = vmatprep.subr.mxu0 0.0
      %1188 = vmatpush1.msra.mxu0 0.0
      %1189 = vmatprep.subr.mxu0 0.0
      %1190 = vmatpush1.msra.mxu0 0.0
      %1191 = vmatprep.subr.mxu0 0.0
      %1192 = vmatpush1.msra.mxu0 0.0
      %1193 = vmatprep.subr.mxu0 0.0
      %1194 = vmatpush1.msra.mxu0 0.0
      %1195 = vmatprep.subr.mxu0 0.0
      %1196 = vmatpush1.msra.mxu0 0.0
      %1197 = vmatprep.subr.mxu0 0.0
      %1198 = vmatpush1.msra.mxu0 0.0
      %1199 = vmatprep.subr.mxu0 0.0
      %1200 = vmatpush1.msra.mxu0 0.0
      %1201 = vmatprep.subr.mxu0 0.0
      %1202 = vmatpush1.msra.mxu0 0.0
      %1203 = vmatprep.subr.mxu0 0.0
      %1204 = vmatpush1.msra.mxu0 0.0
      %1205 = vmatprep.subr.mxu0 0.0
      %1206 = vmatpush1.msra.mxu0 0.0
      %1207 = vmatprep.subr.mxu0 0.0
      %1208 = vmatpush1.msra.mxu0 0.0
      %1209 = vmatprep.subr.mxu0 0.0
      %1210 = vmatpush1.msra.mxu0 0.0
      %1211 = vmatprep.subr.mxu0 0.0
      %1212 = vmatpush1.msra.mxu0 0.0
      %1213 = vmatprep.subr.mxu0 0.0
      %1214 = vmatpush1.msra.mxu0 0.0
      %1215 = vmatprep.subr.mxu0 0.0
      %1216 = vmatpush1.msra.mxu0 0.0
      %1217 = vmatprep.subr.mxu0 0.0
      %1218 = vmatpush1.msra.mxu0 0.0
      %1219 = vmatprep.subr.mxu0 0.0
      %1220 = vmatpush1.msra.mxu0 0.0
      %1221 = vmatprep.subr.mxu0 0.0
      %1222 = vmatpush1.msra.mxu0 0.0
      %1223 = vmatprep.subr.mxu0 0.0
      %1224 = vmatpush1.msra.mxu0 0.0
      %1225 = vmatprep.subr.mxu0 0.0
      %1226 = vmatpush1.msra.mxu0 0.0
      %1227 = vmatprep.subr.mxu0 0.0
      %1228 = vmatpush1.msra.mxu0 0.0
      %1229 = vmatprep.subr.mxu0 0.0
      %1230 = vmatpush1.msra.mxu0 0.0
      %1231 = vmatprep.subr.mxu0 0.0
      %1232 = vmatpush1.msra.mxu0 0.0
      %1233 = vmatprep.subr.mxu0 0.0
      %1234 = vmatpush1.msra.mxu0 0.0
      %1235 = vmatprep.subr.mxu0 0.0
      %1236 = vmatpush1.msra.mxu0 0.0
      %1237 = vmatprep.subr.mxu0 0.0
      %1238 = vmatpush1.msra.mxu0 0.0
      %1239 = vmatprep.subr.mxu0 0.0
      %1240 = vmatpush1.msra.mxu0 0.0
      %1241 = vmatprep.subr.mxu0 0.0
      %1242 = vmatpush1.msra.mxu0 0.0
      %1243 = vmatprep.subr.mxu0 0.0
      %1244 = vmatpush1.msra.mxu0 0.0
      %1245 = vmatprep.subr.mxu0 0.0
      %1246 = vmatpush1.msra.mxu0 0.0
      %1247 = vmatprep.mubr.f32.mxu0 0.0
      %1248 = vmatmul.mubr.f32.gmra.mrb[0].mxu0 %v1175
      %v1249 = vpop.f32.mrb[0].mxu0
      %v1250 = vadd.f32 0.0, %v1249
      %v1251 = vpop.f32.mrb[0].mxu0
      %v1252 = vadd.f32 0.0, %v1251
      %1253 = vdwg.mxu0
      %v1255 = vsel %vm250, %v1163, 0
      %v1258 = vsel %vm254, %v1161, 0
      %v1261 = vsel %vm254, %v1162, 0
      %1263 = vmatprep.subr.mxu0 %v1261
      %1264 = vmatpush1.msra.mxu0 %v1258
      %1265 = vmatprep.subr.mxu0 0.0
      %1266 = vmatpush1.msra.mxu0 0.0
      %1267 = vmatprep.subr.mxu0 0.0
      %1268 = vmatpush1.msra.mxu0 0.0
      %1269 = vmatprep.subr.mxu0 0.0
      %1270 = vmatpush1.msra.mxu0 0.0
      %1271 = vmatprep.subr.mxu0 0.0
      %1272 = vmatpush1.msra.mxu0 0.0
      %1273 = vmatprep.subr.mxu0 0.0
      %1274 = vmatpush1.msra.mxu0 0.0
      %1275 = vmatprep.subr.mxu0 0.0
      %1276 = vmatpush1.msra.mxu0 0.0
      %1277 = vmatprep.subr.mxu0 0.0
      %1278 = vmatpush1.msra.mxu0 0.0
      %1279 = vmatprep.subr.mxu0 0.0
      %1280 = vmatpush1.msra.mxu0 0.0
      %1281 = vmatprep.subr.mxu0 0.0
      %1282 = vmatpush1.msra.mxu0 0.0
      %1283 = vmatprep.subr.mxu0 0.0
      %1284 = vmatpush1.msra.mxu0 0.0
      %1285 = vmatprep.subr.mxu0 0.0
      %1286 = vmatpush1.msra.mxu0 0.0
      %1287 = vmatprep.subr.mxu0 0.0
      %1288 = vmatpush1.msra.mxu0 0.0
      %1289 = vmatprep.subr.mxu0 0.0
      %1290 = vmatpush1.msra.mxu0 0.0
      %1291 = vmatprep.subr.mxu0 0.0
      %1292 = vmatpush1.msra.mxu0 0.0
      %1293 = vmatprep.subr.mxu0 0.0
      %1294 = vmatpush1.msra.mxu0 0.0
      %1295 = vmatprep.subr.mxu0 0.0
      %1296 = vmatpush1.msra.mxu0 0.0
      %1297 = vmatprep.subr.mxu0 0.0
      %1298 = vmatpush1.msra.mxu0 0.0
      %1299 = vmatprep.subr.mxu0 0.0
      %1300 = vmatpush1.msra.mxu0 0.0
      %1301 = vmatprep.subr.mxu0 0.0
      %1302 = vmatpush1.msra.mxu0 0.0
      %1303 = vmatprep.subr.mxu0 0.0
      %1304 = vmatpush1.msra.mxu0 0.0
      %1305 = vmatprep.subr.mxu0 0.0
      %1306 = vmatpush1.msra.mxu0 0.0
      %1307 = vmatprep.subr.mxu0 0.0
      %1308 = vmatpush1.msra.mxu0 0.0
      %1309 = vmatprep.subr.mxu0 0.0
      %1310 = vmatpush1.msra.mxu0 0.0
      %1311 = vmatprep.subr.mxu0 0.0
      %1312 = vmatpush1.msra.mxu0 0.0
      %1313 = vmatprep.subr.mxu0 0.0
      %1314 = vmatpush1.msra.mxu0 0.0
      %1315 = vmatprep.subr.mxu0 0.0
      %1316 = vmatpush1.msra.mxu0 0.0
      %1317 = vmatprep.subr.mxu0 0.0
      %1318 = vmatpush1.msra.mxu0 0.0
      %1319 = vmatprep.subr.mxu0 0.0
      %1320 = vmatpush1.msra.mxu0 0.0
      %1321 = vmatprep.subr.mxu0 0.0
      %1322 = vmatpush1.msra.mxu0 0.0
      %1323 = vmatprep.subr.mxu0 0.0
      %1324 = vmatpush1.msra.mxu0 0.0
      %1325 = vmatprep.subr.mxu0 0.0
      %1326 = vmatpush1.msra.mxu0 0.0
      %1327 = vmatprep.mubr.f32.mxu0 0.0
      %1328 = vmatmul.mubr.f32.gmra.mrb[0].mxu0 %v1255
      %v1329 = vpop.f32.mrb[0].mxu0
      %v1330 = vadd.f32 %v1250, %v1329
      %v1331 = vpop.f32.mrb[0].mxu0
      %v1332 = vadd.f32 %v1252, %v1331
      %1333 = vdwg.mxu0
      %1334 = vrot.lane.b32.xlu0 %v1153, 15
      %v1335 = vpop.permute.xlu0 %1334
      %1336 = vrot.lane.b32.xlu0 %v1154, 15
      %v1337 = vpop.permute.xlu0 %1336
      %v1338 = vsel %vm416, %v1335, %v1337
      %v1339 = vsel %vm416, %v1337, %v1335
      %v1340 = vmul.f32 %v1339, %v425
      %v1341 = vmul.f32 %v1338, %v429
      %s1342 = scalar_lea.vmem %s3, 8
      %v1343 = vld [vmem:[%s1342] sm:$0xf]
      %v1345 = vsel %vm250, %v1343, 0
      %v1348 = vsel %vm254, %v1340, 0
      %v1351 = vsel %vm254, %v1341, 0
      %1353 = vmatprep.subr.mxu0 %v1351
      %1354 = vmatpush1.msra.mxu0 %v1348
      %1355 = vmatprep.subr.mxu0 0.0
      %1356 = vmatpush1.msra.mxu0 0.0
      %1357 = vmatprep.subr.mxu0 0.0
      %1358 = vmatpush1.msra.mxu0 0.0
      %1359 = vmatprep.subr.mxu0 0.0
      %1360 = vmatpush1.msra.mxu0 0.0
      %1361 = vmatprep.subr.mxu0 0.0
      %1362 = vmatpush1.msra.mxu0 0.0
      %1363 = vmatprep.subr.mxu0 0.0
      %1364 = vmatpush1.msra.mxu0 0.0
      %1365 = vmatprep.subr.mxu0 0.0
      %1366 = vmatpush1.msra.mxu0 0.0
      %1367 = vmatprep.subr.mxu0 0.0
      %1368 = vmatpush1.msra.mxu0 0.0
      %1369 = vmatprep.subr.mxu0 0.0
      %1370 = vmatpush1.msra.mxu0 0.0
      %1371 = vmatprep.subr.mxu0 0.0
      %1372 = vmatpush1.msra.mxu0 0.0
      %1373 = vmatprep.subr.mxu0 0.0
      %1374 = vmatpush1.msra.mxu0 0.0
      %1375 = vmatprep.subr.mxu0 0.0
      %1376 = vmatpush1.msra.mxu0 0.0
      %1377 = vmatprep.subr.mxu0 0.0
      %1378 = vmatpush1.msra.mxu0 0.0
      %1379 = vmatprep.subr.mxu0 0.0
      %1380 = vmatpush1.msra.mxu0 0.0
      %1381 = vmatprep.subr.mxu0 0.0
      %1382 = vmatpush1.msra.mxu0 0.0
      %1383 = vmatprep.subr.mxu0 0.0
      %1384 = vmatpush1.msra.mxu0 0.0
      %1385 = vmatprep.subr.mxu0 0.0
      %1386 = vmatpush1.msra.mxu0 0.0
      %1387 = vmatprep.subr.mxu0 0.0
      %1388 = vmatpush1.msra.mxu0 0.0
      %1389 = vmatprep.subr.mxu0 0.0
      %1390 = vmatpush1.msra.mxu0 0.0
      %1391 = vmatprep.subr.mxu0 0.0
      %1392 = vmatpush1.msra.mxu0 0.0
      %1393 = vmatprep.subr.mxu0 0.0
      %1394 = vmatpush1.msra.mxu0 0.0
      %1395 = vmatprep.subr.mxu0 0.0
      %1396 = vmatpush1.msra.mxu0 0.0
      %1397 = vmatprep.subr.mxu0 0.0
      %1398 = vmatpush1.msra.mxu0 0.0
      %1399 = vmatprep.subr.mxu0 0.0
      %1400 = vmatpush1.msra.mxu0 0.0
      %1401 = vmatprep.subr.mxu0 0.0
      %1402 = vmatpush1.msra.mxu0 0.0
      %1403 = vmatprep.subr.mxu0 0.0
      %1404 = vmatpush1.msra.mxu0 0.0
      %1405 = vmatprep.subr.mxu0 0.0
      %1406 = vmatpush1.msra.mxu0 0.0
      %1407 = vmatprep.subr.mxu0 0.0
      %1408 = vmatpush1.msra.mxu0 0.0
      %1409 = vmatprep.subr.mxu0 0.0
      %1410 = vmatpush1.msra.mxu0 0.0
      %1411 = vmatprep.subr.mxu0 0.0
      %1412 = vmatpush1.msra.mxu0 0.0
      %1413 = vmatprep.subr.mxu0 0.0
      %1414 = vmatpush1.msra.mxu0 0.0
      %1415 = vmatprep.subr.mxu0 0.0
      %1416 = vmatpush1.msra.mxu0 0.0
      %1417 = vmatprep.mubr.f32.mxu0 0.0
      %1418 = vmatmul.mubr.f32.gmra.mrb[0].mxu0 %v1345
      %v1419 = vpop.f32.mrb[0].mxu0
      %v1420 = vadd.f32 0.0, %v1419
      %v1421 = vpop.f32.mrb[0].mxu0
      %v1422 = vadd.f32 0.0, %v1421
      %1423 = vdwg.mxu0
      %v1424 = vadd.f32 %v1330, %v1420
      %v1425 = vadd.f32 %v1332, %v1422
      %1426 = vrot.lane.b32.xlu0 %v1153, 1
      %v1427 = vpop.permute.xlu0 %1426
      %1428 = vrot.lane.b32.xlu0 %v1154, 1
      %v1429 = vpop.permute.xlu0 %1428
      %v1430 = vsel %vm522, %v1427, %v1429
      %v1431 = vsel %vm522, %v1429, %v1427
      %v1432 = vmul.f32 %v1431, %v531
      %v1433 = vmul.f32 %v1430, %v535
      %s1434 = scalar_lea.vmem %s3, 12
      %v1435 = vld [vmem:[%s1434] sm:$0xf]
      %v1437 = vsel %vm250, %v1435, 0
      %v1440 = vsel %vm254, %v1432, 0
      %v1443 = vsel %vm254, %v1433, 0
      %1445 = vmatprep.subr.mxu0 %v1443
      %1446 = vmatpush1.msra.mxu0 %v1440
      %1447 = vmatprep.subr.mxu0 0.0
      %1448 = vmatpush1.msra.mxu0 0.0
      %1449 = vmatprep.subr.mxu0 0.0
      %1450 = vmatpush1.msra.mxu0 0.0
      %1451 = vmatprep.subr.mxu0 0.0
      %1452 = vmatpush1.msra.mxu0 0.0
      %1453 = vmatprep.subr.mxu0 0.0
      %1454 = vmatpush1.msra.mxu0 0.0
      %1455 = vmatprep.subr.mxu0 0.0
      %1456 = vmatpush1.msra.mxu0 0.0
      %1457 = vmatprep.subr.mxu0 0.0
      %1458 = vmatpush1.msra.mxu0 0.0
      %1459 = vmatprep.subr.mxu0 0.0
      %1460 = vmatpush1.msra.mxu0 0.0
      %1461 = vmatprep.subr.mxu0 0.0
      %1462 = vmatpush1.msra.mxu0 0.0
      %1463 = vmatprep.subr.mxu0 0.0
      %1464 = vmatpush1.msra.mxu0 0.0
      %1465 = vmatprep.subr.mxu0 0.0
      %1466 = vmatpush1.msra.mxu0 0.0
      %1467 = vmatprep.subr.mxu0 0.0
      %1468 = vmatpush1.msra.mxu0 0.0
      %1469 = vmatprep.subr.mxu0 0.0
      %1470 = vmatpush1.msra.mxu0 0.0
      %1471 = vmatprep.subr.mxu0 0.0
      %1472 = vmatpush1.msra.mxu0 0.0
      %1473 = vmatprep.subr.mxu0 0.0
      %1474 = vmatpush1.msra.mxu0 0.0
      %1475 = vmatprep.subr.mxu0 0.0
      %1476 = vmatpush1.msra.mxu0 0.0
      %1477 = vmatprep.subr.mxu0 0.0
      %1478 = vmatpush1.msra.mxu0 0.0
      %1479 = vmatprep.subr.mxu0 0.0
      %1480 = vmatpush1.msra.mxu0 0.0
      %1481 = vmatprep.subr.mxu0 0.0
      %1482 = vmatpush1.msra.mxu0 0.0
      %1483 = vmatprep.subr.mxu0 0.0
      %1484 = vmatpush1.msra.mxu0 0.0
      %1485 = vmatprep.subr.mxu0 0.0
      %1486 = vmatpush1.msra.mxu0 0.0
      %1487 = vmatprep.subr.mxu0 0.0
      %1488 = vmatpush1.msra.mxu0 0.0
      %1489 = vmatprep.subr.mxu0 0.0
      %1490 = vmatpush1.msra.mxu0 0.0
      %1491 = vmatprep.subr.mxu0 0.0
      %1492 = vmatpush1.msra.mxu0 0.0
      %1493 = vmatprep.subr.mxu0 0.0
      %1494 = vmatpush1.msra.mxu0 0.0
      %1495 = vmatprep.subr.mxu0 0.0
      %1496 = vmatpush1.msra.mxu0 0.0
      %1497 = vmatprep.subr.mxu0 0.0
      %1498 = vmatpush1.msra.mxu0 0.0
      %1499 = vmatprep.subr.mxu0 0.0
      %1500 = vmatpush1.msra.mxu0 0.0
      %1501 = vmatprep.subr.mxu0 0.0
      %1502 = vmatpush1.msra.mxu0 0.0
      %1503 = vmatprep.subr.mxu0 0.0
      %1504 = vmatpush1.msra.mxu0 0.0
      %1505 = vmatprep.subr.mxu0 0.0
      %1506 = vmatpush1.msra.mxu0 0.0
      %1507 = vmatprep.subr.mxu0 0.0
      %1508 = vmatpush1.msra.mxu0 0.0
      %1509 = vmatprep.mubr.f32.mxu0 0.0
      %1510 = vmatmul.mubr.f32.gmra.mrb[0].mxu0 %v1437
      %v1511 = vpop.f32.mrb[0].mxu0
      %v1512 = vadd.f32 0.0, %v1511
      %v1513 = vpop.f32.mrb[0].mxu0
      %v1514 = vadd.f32 0.0, %v1513
      %1515 = vdwg.mxu0
      %v1516 = vadd.f32 %v1424, %v1512
      %v1517 = vadd.f32 %v1425, %v1514
      %s1518 = scalar_lea.vmem %s3, 16
      %v1519 = vld [vmem:[%s1518] sm:$0xf]
      %v1521 = vsel %vm250, %v1519, 0
      %v1524 = vsel %vm254, %v1153, 0
      %v1527 = vsel %vm254, %v1154, 0
      %1529 = vmatprep.subr.mxu0 %v1527
      %1530 = vmatpush1.msra.mxu0 %v1524
      %1531 = vmatprep.subr.mxu0 0.0
      %1532 = vmatpush1.msra.mxu0 0.0
      %1533 = vmatprep.subr.mxu0 0.0
      %1534 = vmatpush1.msra.mxu0 0.0
      %1535 = vmatprep.subr.mxu0 0.0
      %1536 = vmatpush1.msra.mxu0 0.0
      %1537 = vmatprep.subr.mxu0 0.0
      %1538 = vmatpush1.msra.mxu0 0.0
      %1539 = vmatprep.subr.mxu0 0.0
      %1540 = vmatpush1.msra.mxu0 0.0
      %1541 = vmatprep.subr.mxu0 0.0
      %1542 = vmatpush1.msra.mxu0 0.0
      %1543 = vmatprep.subr.mxu0 0.0
      %1544 = vmatpush1.msra.mxu0 0.0
      %1545 = vmatprep.subr.mxu0 0.0
      %1546 = vmatpush1.msra.mxu0 0.0
      %1547 = vmatprep.subr.mxu0 0.0
      %1548 = vmatpush1.msra.mxu0 0.0
      %1549 = vmatprep.subr.mxu0 0.0
      %1550 = vmatpush1.msra.mxu0 0.0
      %1551 = vmatprep.subr.mxu0 0.0
      %1552 = vmatpush1.msra.mxu0 0.0
      %1553 = vmatprep.subr.mxu0 0.0
      %1554 = vmatpush1.msra.mxu0 0.0
      %1555 = vmatprep.subr.mxu0 0.0
      %1556 = vmatpush1.msra.mxu0 0.0
      %1557 = vmatprep.subr.mxu0 0.0
      %1558 = vmatpush1.msra.mxu0 0.0
      %1559 = vmatprep.subr.mxu0 0.0
      %1560 = vmatpush1.msra.mxu0 0.0
      %1561 = vmatprep.subr.mxu0 0.0
      %1562 = vmatpush1.msra.mxu0 0.0
      %1563 = vmatprep.subr.mxu0 0.0
      %1564 = vmatpush1.msra.mxu0 0.0
      %1565 = vmatprep.subr.mxu0 0.0
      %1566 = vmatpush1.msra.mxu0 0.0
      %1567 = vmatprep.subr.mxu0 0.0
      %1568 = vmatpush1.msra.mxu0 0.0
      %1569 = vmatprep.subr.mxu0 0.0
      %1570 = vmatpush1.msra.mxu0 0.0
      %1571 = vmatprep.subr.mxu0 0.0
      %1572 = vmatpush1.msra.mxu0 0.0
      %1573 = vmatprep.subr.mxu0 0.0
      %1574 = vmatpush1.msra.mxu0 0.0
      %1575 = vmatprep.subr.mxu0 0.0
      %1576 = vmatpush1.msra.mxu0 0.0
      %1577 = vmatprep.subr.mxu0 0.0
      %1578 = vmatpush1.msra.mxu0 0.0
      %1579 = vmatprep.subr.mxu0 0.0
      %1580 = vmatpush1.msra.mxu0 0.0
      %1581 = vmatprep.subr.mxu0 0.0
      %1582 = vmatpush1.msra.mxu0 0.0
      %1583 = vmatprep.subr.mxu0 0.0
      %1584 = vmatpush1.msra.mxu0 0.0
      %1585 = vmatprep.subr.mxu0 0.0
      %1586 = vmatpush1.msra.mxu0 0.0
      %1587 = vmatprep.subr.mxu0 0.0
      %1588 = vmatpush1.msra.mxu0 0.0
      %1589 = vmatprep.subr.mxu0 0.0
      %1590 = vmatpush1.msra.mxu0 0.0
      %1591 = vmatprep.subr.mxu0 0.0
      %1592 = vmatpush1.msra.mxu0 0.0
      %1593 = vmatprep.mubr.f32.mxu0 0.0
      %1594 = vmatmul.mubr.f32.gmra.mrb[0].mxu0 %v1521
      %v1595 = vpop.f32.mrb[0].mxu0
      %v1596 = vadd.f32 0.0, %v1595
      %v1597 = vpop.f32.mrb[0].mxu0
      %v1598 = vadd.f32 0.0, %v1597
      %1599 = vdwg.mxu0
      %v1600 = vadd.f32 %v1516, %v1596
      %v1601 = vadd.f32 %v1517, %v1598
      %1602 = vrot.lane.b32.xlu0 %v1153, 127
      %v1603 = vpop.permute.xlu0 %1602
      %1604 = vrot.lane.b32.xlu0 %v1154, 127
      %v1605 = vpop.permute.xlu0 %1604
      %v1606 = vsel %vm710, %v1603, %v1605
      %v1607 = vsel %vm710, %v1605, %v1603
      %v1608 = vmul.f32 %v1606, %v719
      %v1609 = vmul.f32 %v1607, %v723
      %s1610 = scalar_lea.vmem %s3, 20
      %v1611 = vld [vmem:[%s1610] sm:$0xf]
      %v1613 = vsel %vm250, %v1611, 0
      %v1616 = vsel %vm254, %v1608, 0
      %v1619 = vsel %vm254, %v1609, 0
      %1621 = vmatprep.subr.mxu0 %v1619
      %1622 = vmatpush1.msra.mxu0 %v1616
      %1623 = vmatprep.subr.mxu0 0.0
      %1624 = vmatpush1.msra.mxu0 0.0
      %1625 = vmatprep.subr.mxu0 0.0
      %1626 = vmatpush1.msra.mxu0 0.0
      %1627 = vmatprep.subr.mxu0 0.0
      %1628 = vmatpush1.msra.mxu0 0.0
      %1629 = vmatprep.subr.mxu0 0.0
      %1630 = vmatpush1.msra.mxu0 0.0
      %1631 = vmatprep.subr.mxu0 0.0
      %1632 = vmatpush1.msra.mxu0 0.0
      %1633 = vmatprep.subr.mxu0 0.0
      %1634 = vmatpush1.msra.mxu0 0.0
      %1635 = vmatprep.subr.mxu0 0.0
      %1636 = vmatpush1.msra.mxu0 0.0
      %1637 = vmatprep.subr.mxu0 0.0
      %1638 = vmatpush1.msra.mxu0 0.0
      %1639 = vmatprep.subr.mxu0 0.0
      %1640 = vmatpush1.msra.mxu0 0.0
      %1641 = vmatprep.subr.mxu0 0.0
      %1642 = vmatpush1.msra.mxu0 0.0
      %1643 = vmatprep.subr.mxu0 0.0
      %1644 = vmatpush1.msra.mxu0 0.0
      %1645 = vmatprep.subr.mxu0 0.0
      %1646 = vmatpush1.msra.mxu0 0.0
      %1647 = vmatprep.subr.mxu0 0.0
      %1648 = vmatpush1.msra.mxu0 0.0
      %1649 = vmatprep.subr.mxu0 0.0
      %1650 = vmatpush1.msra.mxu0 0.0
      %1651 = vmatprep.subr.mxu0 0.0
      %1652 = vmatpush1.msra.mxu0 0.0
      %1653 = vmatprep.subr.mxu0 0.0
      %1654 = vmatpush1.msra.mxu0 0.0
      %1655 = vmatprep.subr.mxu0 0.0
      %1656 = vmatpush1.msra.mxu0 0.0
      %1657 = vmatprep.subr.mxu0 0.0
      %1658 = vmatpush1.msra.mxu0 0.0
      %1659 = vmatprep.subr.mxu0 0.0
      %1660 = vmatpush1.msra.mxu0 0.0
      %1661 = vmatprep.subr.mxu0 0.0
      %1662 = vmatpush1.msra.mxu0 0.0
      %1663 = vmatprep.subr.mxu0 0.0
      %1664 = vmatpush1.msra.mxu0 0.0
      %1665 = vmatprep.subr.mxu0 0.0
      %1666 = vmatpush1.msra.mxu0 0.0
      %1667 = vmatprep.subr.mxu0 0.0
      %1668 = vmatpush1.msra.mxu0 0.0
      %1669 = vmatprep.subr.mxu0 0.0
      %1670 = vmatpush1.msra.mxu0 0.0
      %1671 = vmatprep.subr.mxu0 0.0
      %1672 = vmatpush1.msra.mxu0 0.0
      %1673 = vmatprep.subr.mxu0 0.0
      %1674 = vmatpush1.msra.mxu0 0.0
      %1675 = vmatprep.subr.mxu0 0.0
      %1676 = vmatpush1.msra.mxu0 0.0
      %1677 = vmatprep.subr.mxu0 0.0
      %1678 = vmatpush1.msra.mxu0 0.0
      %1679 = vmatprep.subr.mxu0 0.0
      %1680 = vmatpush1.msra.mxu0 0.0
      %1681 = vmatprep.subr.mxu0 0.0
      %1682 = vmatpush1.msra.mxu0 0.0
      %1683 = vmatprep.subr.mxu0 0.0
      %1684 = vmatpush1.msra.mxu0 0.0
      %1685 = vmatprep.mubr.f32.mxu0 0.0
      %1686 = vmatmul.mubr.f32.gmra.mrb[0].mxu0 %v1613
      %v1687 = vpop.f32.mrb[0].mxu0
      %v1688 = vadd.f32 0.0, %v1687
      %v1689 = vpop.f32.mrb[0].mxu0
      %v1690 = vadd.f32 0.0, %v1689
      %1691 = vdwg.mxu0
      %v1692 = vadd.f32 %v1600, %v1688
      %v1693 = vadd.f32 %v1601, %v1690
      %1694 = vrot.lane.b32.xlu0 %v1153, 113
      %v1695 = vpop.permute.xlu0 %1694
      %1696 = vrot.lane.b32.xlu0 %v1154, 113
      %v1697 = vpop.permute.xlu0 %1696
      %v1698 = vsel %vm816, %v1695, %v1697
      %v1699 = vsel %vm816, %v1697, %v1695
      %v1700 = vmul.f32 %v1698, %v825
      %v1701 = vmul.f32 %v1699, %v829
      %s1702 = scalar_lea.vmem %s3, 24
      %v1703 = vld [vmem:[%s1702] sm:$0xf]
      %v1705 = vsel %vm250, %v1703, 0
      %v1708 = vsel %vm254, %v1700, 0
      %v1711 = vsel %vm254, %v1701, 0
      %1713 = vmatprep.subr.mxu0 %v1711
      %1714 = vmatpush1.msra.mxu0 %v1708
      %1715 = vmatprep.subr.mxu0 0.0
      %1716 = vmatpush1.msra.mxu0 0.0
      %1717 = vmatprep.subr.mxu0 0.0
      %1718 = vmatpush1.msra.mxu0 0.0
      %1719 = vmatprep.subr.mxu0 0.0
      %1720 = vmatpush1.msra.mxu0 0.0
      %1721 = vmatprep.subr.mxu0 0.0
      %1722 = vmatpush1.msra.mxu0 0.0
      %1723 = vmatprep.subr.mxu0 0.0
      %1724 = vmatpush1.msra.mxu0 0.0
      %1725 = vmatprep.subr.mxu0 0.0
      %1726 = vmatpush1.msra.mxu0 0.0
      %1727 = vmatprep.subr.mxu0 0.0
      %1728 = vmatpush1.msra.mxu0 0.0
      %1729 = vmatprep.subr.mxu0 0.0
      %1730 = vmatpush1.msra.mxu0 0.0
      %1731 = vmatprep.subr.mxu0 0.0
      %1732 = vmatpush1.msra.mxu0 0.0
      %1733 = vmatprep.subr.mxu0 0.0
      %1734 = vmatpush1.msra.mxu0 0.0
      %1735 = vmatprep.subr.mxu0 0.0
      %1736 = vmatpush1.msra.mxu0 0.0
      %1737 = vmatprep.subr.mxu0 0.0
      %1738 = vmatpush1.msra.mxu0 0.0
      %1739 = vmatprep.subr.mxu0 0.0
      %1740 = vmatpush1.msra.mxu0 0.0
      %1741 = vmatprep.subr.mxu0 0.0
      %1742 = vmatpush1.msra.mxu0 0.0
      %1743 = vmatprep.subr.mxu0 0.0
      %1744 = vmatpush1.msra.mxu0 0.0
      %1745 = vmatprep.subr.mxu0 0.0
      %1746 = vmatpush1.msra.mxu0 0.0
      %1747 = vmatprep.subr.mxu0 0.0
      %1748 = vmatpush1.msra.mxu0 0.0
      %1749 = vmatprep.subr.mxu0 0.0
      %1750 = vmatpush1.msra.mxu0 0.0
      %1751 = vmatprep.subr.mxu0 0.0
      %1752 = vmatpush1.msra.mxu0 0.0
      %1753 = vmatprep.subr.mxu0 0.0
      %1754 = vmatpush1.msra.mxu0 0.0
      %1755 = vmatprep.subr.mxu0 0.0
      %1756 = vmatpush1.msra.mxu0 0.0
      %1757 = vmatprep.subr.mxu0 0.0
      %1758 = vmatpush1.msra.mxu0 0.0
      %1759 = vmatprep.subr.mxu0 0.0
      %1760 = vmatpush1.msra.mxu0 0.0
      %1761 = vmatprep.subr.mxu0 0.0
      %1762 = vmatpush1.msra.mxu0 0.0
      %1763 = vmatprep.subr.mxu0 0.0
      %1764 = vmatpush1.msra.mxu0 0.0
      %1765 = vmatprep.subr.mxu0 0.0
      %1766 = vmatpush1.msra.mxu0 0.0
      %1767 = vmatprep.subr.mxu0 0.0
      %1768 = vmatpush1.msra.mxu0 0.0
      %1769 = vmatprep.subr.mxu0 0.0
      %1770 = vmatpush1.msra.mxu0 0.0
      %1771 = vmatprep.subr.mxu0 0.0
      %1772 = vmatpush1.msra.mxu0 0.0
      %1773 = vmatprep.subr.mxu0 0.0
      %1774 = vmatpush1.msra.mxu0 0.0
      %1775 = vmatprep.subr.mxu0 0.0
      %1776 = vmatpush1.msra.mxu0 0.0
      %1777 = vmatprep.mubr.f32.mxu0 0.0
      %1778 = vmatmul.mubr.f32.gmra.mrb[0].mxu0 %v1705
      %v1779 = vpop.f32.mrb[0].mxu0
      %v1780 = vadd.f32 0.0, %v1779
      %v1781 = vpop.f32.mrb[0].mxu0
      %v1782 = vadd.f32 0.0, %v1781
      %1783 = vdwg.mxu0
      %v1784 = vadd.f32 %v1692, %v1780
      %v1785 = vadd.f32 %v1693, %v1782
      %1786 = vrot.lane.b32.xlu0 %v1153, 112
      %v1787 = vpop.permute.xlu0 %1786
      %1788 = vrot.lane.b32.xlu0 %v1154, 112
      %v1789 = vpop.permute.xlu0 %1788
      %v1790 = vsel %vm922, %v1787, %v1789
      %v1791 = vsel %vm922, %v1789, %v1787
      %v1792 = vmul.f32 %v1790, %v931
      %v1793 = vmul.f32 %v1791, %v935
      %s1794 = scalar_lea.vmem %s3, 28
      %v1795 = vld [vmem:[%s1794] sm:$0xf]
      %v1797 = vsel %vm250, %v1795, 0
      %v1800 = vsel %vm254, %v1792, 0
      %v1803 = vsel %vm254, %v1793, 0
      %1805 = vmatprep.subr.mxu0 %v1803
      %1806 = vmatpush1.msra.mxu0 %v1800
      %1807 = vmatprep.subr.mxu0 0.0
      %1808 = vmatpush1.msra.mxu0 0.0
      %1809 = vmatprep.subr.mxu0 0.0
      %1810 = vmatpush1.msra.mxu0 0.0
      %1811 = vmatprep.subr.mxu0 0.0
      %1812 = vmatpush1.msra.mxu0 0.0
      %1813 = vmatprep.subr.mxu0 0.0
      %1814 = vmatpush1.msra.mxu0 0.0
      %1815 = vmatprep.subr.mxu0 0.0
      %1816 = vmatpush1.msra.mxu0 0.0
      %1817 = vmatprep.subr.mxu0 0.0
      %1818 = vmatpush1.msra.mxu0 0.0
      %1819 = vmatprep.subr.mxu0 0.0
      %1820 = vmatpush1.msra.mxu0 0.0
      %1821 = vmatprep.subr.mxu0 0.0
      %1822 = vmatpush1.msra.mxu0 0.0
      %1823 = vmatprep.subr.mxu0 0.0
      %1824 = vmatpush1.msra.mxu0 0.0
      %1825 = vmatprep.subr.mxu0 0.0
      %1826 = vmatpush1.msra.mxu0 0.0
      %1827 = vmatprep.subr.mxu0 0.0
      %1828 = vmatpush1.msra.mxu0 0.0
      %1829 = vmatprep.subr.mxu0 0.0
      %1830 = vmatpush1.msra.mxu0 0.0
      %1831 = vmatprep.subr.mxu0 0.0
      %1832 = vmatpush1.msra.mxu0 0.0
      %1833 = vmatprep.subr.mxu0 0.0
      %1834 = vmatpush1.msra.mxu0 0.0
      %1835 = vmatprep.subr.mxu0 0.0
      %1836 = vmatpush1.msra.mxu0 0.0
      %1837 = vmatprep.subr.mxu0 0.0
      %1838 = vmatpush1.msra.mxu0 0.0
      %1839 = vmatprep.subr.mxu0 0.0
      %1840 = vmatpush1.msra.mxu0 0.0
      %1841 = vmatprep.subr.mxu0 0.0
      %1842 = vmatpush1.msra.mxu0 0.0
      %1843 = vmatprep.subr.mxu0 0.0
      %1844 = vmatpush1.msra.mxu0 0.0
      %1845 = vmatprep.subr.mxu0 0.0
      %1846 = vmatpush1.msra.mxu0 0.0
      %1847 = vmatprep.subr.mxu0 0.0
      %1848 = vmatpush1.msra.mxu0 0.0
      %1849 = vmatprep.subr.mxu0 0.0
      %1850 = vmatpush1.msra.mxu0 0.0
      %1851 = vmatprep.subr.mxu0 0.0
      %1852 = vmatpush1.msra.mxu0 0.0
      %1853 = vmatprep.subr.mxu0 0.0
      %1854 = vmatpush1.msra.mxu0 0.0
      %1855 = vmatprep.subr.mxu0 0.0
      %1856 = vmatpush1.msra.mxu0 0.0
      %1857 = vmatprep.subr.mxu0 0.0
      %1858 = vmatpush1.msra.mxu0 0.0
      %1859 = vmatprep.subr.mxu0 0.0
      %1860 = vmatpush1.msra.mxu0 0.0
      %1861 = vmatprep.subr.mxu0 0.0
      %1862 = vmatpush1.msra.mxu0 0.0
      %1863 = vmatprep.subr.mxu0 0.0
      %1864 = vmatpush1.msra.mxu0 0.0
      %1865 = vmatprep.subr.mxu0 0.0
      %1866 = vmatpush1.msra.mxu0 0.0
      %1867 = vmatprep.subr.mxu0 0.0
      %1868 = vmatpush1.msra.mxu0 0.0
      %1869 = vmatprep.mubr.f32.mxu0 0.0
      %1870 = vmatmul.mubr.f32.gmra.mrb[0].mxu0 %v1797
      %v1871 = vpop.f32.mrb[0].mxu0
      %v1872 = vadd.f32 0.0, %v1871
      %v1873 = vpop.f32.mrb[0].mxu0
      %v1874 = vadd.f32 0.0, %v1873
      %1875 = vdwg.mxu0
      %v1876 = vadd.f32 %v1784, %v1872
      %v1877 = vadd.f32 %v1785, %v1874
      %1878 = vrot.lane.b32.xlu0 %v1153, 111
      %v1879 = vpop.permute.xlu0 %1878
      %1880 = vrot.lane.b32.xlu0 %v1154, 111
      %v1881 = vpop.permute.xlu0 %1880
      %v1882 = vsel %vm1028, %v1879, %v1881
      %v1883 = vsel %vm1028, %v1881, %v1879
      %v1884 = vmul.f32 %v1882, %v1037
      %v1885 = vmul.f32 %v1883, %v1041
      %s1886 = scalar_lea.vmem %s3, 32
      %v1887 = vld [vmem:[%s1886] sm:$0xf]
      %v1889 = vsel %vm250, %v1887, 0
      %v1892 = vsel %vm254, %v1884, 0
      %v1895 = vsel %vm254, %v1885, 0
      %1897 = vmatprep.subr.mxu0 %v1895
      %1898 = vmatpush1.msra.mxu0 %v1892
      %1899 = vmatprep.subr.mxu0 0.0
      %1900 = vmatpush1.msra.mxu0 0.0
      %1901 = vmatprep.subr.mxu0 0.0
      %1902 = vmatpush1.msra.mxu0 0.0
      %1903 = vmatprep.subr.mxu0 0.0
      %1904 = vmatpush1.msra.mxu0 0.0
      %1905 = vmatprep.subr.mxu0 0.0
      %1906 = vmatpush1.msra.mxu0 0.0
      %1907 = vmatprep.subr.mxu0 0.0
      %1908 = vmatpush1.msra.mxu0 0.0
      %1909 = vmatprep.subr.mxu0 0.0
      %1910 = vmatpush1.msra.mxu0 0.0
      %1911 = vmatprep.subr.mxu0 0.0
      %1912 = vmatpush1.msra.mxu0 0.0
      %1913 = vmatprep.subr.mxu0 0.0
      %1914 = vmatpush1.msra.mxu0 0.0
      %1915 = vmatprep.subr.mxu0 0.0
      %1916 = vmatpush1.msra.mxu0 0.0
      %1917 = vmatprep.subr.mxu0 0.0
      %1918 = vmatpush1.msra.mxu0 0.0
      %1919 = vmatprep.subr.mxu0 0.0
      %1920 = vmatpush1.msra.mxu0 0.0
      %1921 = vmatprep.subr.mxu0 0.0
      %1922 = vmatpush1.msra.mxu0 0.0
      %1923 = vmatprep.subr.mxu0 0.0
      %1924 = vmatpush1.msra.mxu0 0.0
      %1925 = vmatprep.subr.mxu0 0.0
      %1926 = vmatpush1.msra.mxu0 0.0
      %1927 = vmatprep.subr.mxu0 0.0
      %1928 = vmatpush1.msra.mxu0 0.0
      %1929 = vmatprep.subr.mxu0 0.0
      %1930 = vmatpush1.msra.mxu0 0.0
      %1931 = vmatprep.subr.mxu0 0.0
      %1932 = vmatpush1.msra.mxu0 0.0
      %1933 = vmatprep.subr.mxu0 0.0
      %1934 = vmatpush1.msra.mxu0 0.0
      %1935 = vmatprep.subr.mxu0 0.0
      %1936 = vmatpush1.msra.mxu0 0.0
      %1937 = vmatprep.subr.mxu0 0.0
      %1938 = vmatpush1.msra.mxu0 0.0
      %1939 = vmatprep.subr.mxu0 0.0
      %1940 = vmatpush1.msra.mxu0 0.0
      %1941 = vmatprep.subr.mxu0 0.0
      %1942 = vmatpush1.msra.mxu0 0.0
      %1943 = vmatprep.subr.mxu0 0.0
      %1944 = vmatpush1.msra.mxu0 0.0
      %1945 = vmatprep.subr.mxu0 0.0
      %1946 = vmatpush1.msra.mxu0 0.0
      %1947 = vmatprep.subr.mxu0 0.0
      %1948 = vmatpush1.msra.mxu0 0.0
      %1949 = vmatprep.subr.mxu0 0.0
      %1950 = vmatpush1.msra.mxu0 0.0
      %1951 = vmatprep.subr.mxu0 0.0
      %1952 = vmatpush1.msra.mxu0 0.0
      %1953 = vmatprep.subr.mxu0 0.0
      %1954 = vmatpush1.msra.mxu0 0.0
      %1955 = vmatprep.subr.mxu0 0.0
      %1956 = vmatpush1.msra.mxu0 0.0
      %1957 = vmatprep.subr.mxu0 0.0
      %1958 = vmatpush1.msra.mxu0 0.0
      %1959 = vmatprep.subr.mxu0 0.0
      %1960 = vmatpush1.msra.mxu0 0.0
      %1961 = vmatprep.mubr.f32.mxu0 0.0
      %1962 = vmatmul.mubr.f32.gmra.mrb[0].mxu0 %v1889
      %v1963 = vpop.f32.mrb[0].mxu0
      %v1964 = vadd.f32 0.0, %v1963
      %v1965 = vpop.f32.mrb[0].mxu0
      %v1966 = vadd.f32 0.0, %v1965
      %1967 = vdwg.mxu0
      %v1968 = vadd.f32 %v1876, %v1964
      %v1969 = vadd.f32 %v1877, %v1966
      %v1970 = vsel %vm254, %v1968, 0.0
      %v1971 = vsel %vm254, %v1969, 0.0
      %v1972 = vadd.f32 %v1970, %v1971
      %1973 = vadd.xlane.f32.xlu0 %v1972
      %v1974 = vpop.xlane.xlu0 %1973
      %v1975 = vmul.f32 %v1974, %v1135
      %v1976 = vmul.f32 %v1968, %v1968
      %v1977 = vmul.f32 %v1969, %v1969
      %v1978 = vsel %vm254, %v1976, 0.0
      %v1979 = vsel %vm254, %v1977, 0.0
      %v1980 = vadd.f32 %v1978, %v1979
      %1981 = vadd.xlane.f32.xlu0 %v1980
      %v1982 = vpop.xlane.xlu0 %1981
      %v1983 = vmul.f32 %v1982, %v1135
      %v1984 = vmul.f32 %v1975, %v1975
      %v1985 = vsub.f32 %v1983, %v1984
      %v1986 = vsub.f32 %v1968, %v1975
      %v1987 = vsub.f32 %v1969, %v1975
      %v1988 = vadd.f32 %v1985, 1e-05
      %v1989 = vrsqrt.pop %v1988
      %v1990 = vmul.f32 %v1986, %v1989
      %v1991 = vmul.f32 %v1987, %v1989
      %v1992 = vadd.f32 %v1990, %v198
      %v1993 = vadd.f32 %v1991, %v200
      %v1996 = vcombine.low %v1992, %v1993
      %1998 = vst [vmem:[%s197] sm:$0xff] %v1996
      %p1999 = scmp.lt.s32.totalorder %s15, 1
      %s2000 = scalar_select %p1999, %s15, 1
      %s2001 = smul.addr %s2000, 2
      %s2002 = smul.addr %s2001, 4
      %s2003 = scalar_lea.vmem %s4, %s2002
      // Predicated region
      $region37: #{resblock_pallas.1} parent=35 // pred_check
        %p2004 = pneg %p122
      $region38: #{resblock_pallas.1} parent=35 // pred_check_branch
        %2006 = sbr.rel (%p2004) target = $region40
      $region39: #{resblock_pallas.1} parent=35 // pred_region
        _
      $region40: #{resblock_pallas.1} parent=35 // pred_fallthru
        _
    $region36: #{resblock_pallas.1} parent=5 // pred_fallthru
      _
    %p2007 = scmp.le.s32.totalorder 2, %s10
    // Predicated region
    $region41: #{resblock_pallas.1} parent=5 // pred_check
      %p2008 = pneg %p2007
    $region42: #{resblock_pallas.1} parent=5 // pred_check_branch
      %2010 = sbr.rel (%p2008) target = $region44
    $region43: #{resblock_pallas.1} parent=5 // pred_region
      %s2011 = ssub.s32 %s10, 2
      // Predicated region
      $region45: #{resblock_pallas.1} parent=43 // pred_check
        %p2012 = pneg %p128
      $region46: #{resblock_pallas.1} parent=43 // pred_check_branch
        %2014 = sbr.rel (%p2012) target = $region48
      $region47: #{resblock_pallas.1} parent=43 // pred_region
        %p2015 = scmp.lt.s32.totalorder %s16, 1
        %s2016 = scalar_select %p2015, %s16, 1
        %s2017 = smul.addr %s2016, 2
        %s2018 = smul.addr %s2017, 4
        %s2019 = scalar_lea.vmem %s4, %s2018
      $region48: #{resblock_pallas.1} parent=43 // pred_fallthru
        _
    $region44: #{resblock_pallas.1} parent=5 // pred_fallthru
      _
  $region6: #{resblock_pallas.1} parent=0 // loop_footer
    %s14 = sadd.s32 1, %s10
  $region7: #{resblock_pallas.1} parent=0 // loop_footer_branch
    %9 = sbr.rel target = $region3
  $region8: #{resblock_pallas.1} parent=0 // loop_exit
    _

</llo_original>
